<compile_context>
chip_gen: v6e
topology: v6e:2x2x1
jax: 0.10.0
libtpu: 0.0.40
codegen_flags: <defaults>
</compile_context>

<pallas_src>
import functools

import jax
import jax.numpy as jnp
from jax.experimental import pallas as pl
from jax.experimental.pallas import tpu as pltpu

# Module hyper-parameters (kernel is shape-generic in in_dim / batch; the toy
# image size keeps the self-test fast, the real module uses 3x128x128).
CHANNELS = 3
IMG_SIZE = 16
IMG_SHAPE = (CHANNELS, IMG_SIZE, IMG_SIZE)
IN_DIM = CHANNELS * IMG_SIZE * IMG_SIZE  # 768
H1 = 512
H2 = 256
OUT = 1
OUT_PAD = 128          # lane-dense final layer / output
TK_MAX = 2048          # K tile: 2 x (2048*512*2B) = 4 MiB double-buffered W1 (bf16)


def _round_up(x, m):
    return ((x + m - 1) // m) * m


def _mlp_kernel(x_ref, w1_ref, b1_ref, w2_ref, b2_ref, w3_ref, b3_ref,
                o_ref, h1_acc):
    """K-tiled layer 1 with f32 accumulator; fused epilogue on the last tile."""
    k = pl.program_id(0)

    @pl.when(k == 0)
    def _():
        h1_acc[...] = jnp.zeros_like(h1_acc)

    # Layer 1 partial product: (b_pad, tk) @ (tk, H1), bf16 in, f32 accumulate.
    h1_acc[...] += jnp.dot(x_ref[...], w1_ref[...],
                           preferred_element_type=jnp.float32)

    @pl.when(k == pl.num_programs(0) - 1)
    def _():
        # Layer 1 bias + LeakyReLU(0.2) on the f32 accumulator.
        h = h1_acc[...] + b1_ref[...]
        h = jnp.where(h > 0, h, 0.2 * h)

        # Layer 2: Linear(512, 256) + LeakyReLU(0.2)  (weights resident, f32).
        h = jnp.dot(h, w2_ref[...], preferred_element_type=jnp.float32) + b2_ref[...]
        h = jnp.where(h > 0, h, 0.2 * h)

        # Layer 3 (lane-padded to 128 cols) + Sigmoid.
        h = jnp.dot(h, w3_ref[...], preferred_element_type=jnp.float32) + b3_ref[...]
        o_ref[...] = (1.0 / (1.0 + jnp.exp(-h))).astype(o_ref.dtype)


def _vmem_footprint_bytes(b_pad, tk):
    """Approximate VMEM use (double-buffered pipeline blocks + scratch)."""
    dbl = 2  # BlockSpec double buffering
    by = 0
    by += dbl * b_pad * tk * 2                      # x tile (bf16)
    by += dbl * tk * H1 * 2                         # w1 tile (bf16)
    by += dbl * (H1 + H1 * H2 + H2 + H2 * OUT_PAD + OUT_PAD) * 4  # small weights (f32)
    by += dbl * b_pad * OUT_PAD * 4                 # output tile
    by += b_pad * H1 * 4                            # h1 accumulator scratch
    return by


@functools.partial(jax.jit)
def discriminador_forward(imagen, params):
    """imagen: (B, C, H, W) float32 (NCHW, like PyTorch). Returns (B, 1) f32."""
    w1, b1, w2, b2, w3, b3 = params
    b = imagen.shape[0]
    in_dim = imagen.shape[1] * imagen.shape[2] * imagen.shape[3]

    # Flatten exactly like `imagen.view(B, -1)` (row-major over C, H, W).
    x = imagen.reshape(b, in_dim)

    # Pad batch to a sublane multiple (8).
    b_pad = max(8, _round_up(b, 8))

    # Choose the K tile: big (2048) when streaming a big W1, otherwise one tile.
    if in_dim >= TK_MAX:
        tk = TK_MAX
    else:
        tk = _round_up(in_dim, 256)
    k_pad = _round_up(in_dim, tk)
    num_k = k_pad // tk

    # Pad + cast the streamed operands to bf16 (f32 accumulation in-kernel).
    x_p = jnp.pad(x, ((0, b_pad - b), (0, k_pad - in_dim))).astype(jnp.bfloat16)
    w1_p = jnp.pad(w1, ((0, k_pad - in_dim), (0, 0))).astype(jnp.bfloat16)

    # Lane-dense final layer: zero-pad w3/b3 to 128 output columns.
    w3_p = jnp.pad(w3, ((0, 0), (0, OUT_PAD - OUT)))
    b3_p = jnp.pad(b3, ((0, 0), (0, OUT_PAD - OUT)))

    vmem_limit = int(min(48 << 20, max(2 * _vmem_footprint_bytes(b_pad, tk),
                                       16 << 20)))

    out = pl.pallas_call(
        _mlp_kernel,
        out_shape=jax.ShapeDtypeStruct((b_pad, OUT_PAD), jnp.float32),
        grid_spec=pltpu.PrefetchScalarGridSpec(
            num_scalar_prefetch=0,
            grid=(num_k,),
            in_specs=[
                pl.BlockSpec((b_pad, tk), lambda k: (0, k)),   # x (K-tiled)
                pl.BlockSpec((tk, H1), lambda k: (k, 0)),      # W1 (K-tiled)
                pl.BlockSpec((1, H1), lambda k: (0, 0)),       # b1 (resident)
                pl.BlockSpec((H1, H2), lambda k: (0, 0)),      # W2 (resident)
                pl.BlockSpec((1, H2), lambda k: (0, 0)),       # b2 (resident)
                pl.BlockSpec((H2, OUT_PAD), lambda k: (0, 0)), # W3 (lane-padded)
                pl.BlockSpec((1, OUT_PAD), lambda k: (0, 0)),  # b3 (lane-padded)
            ],
            out_specs=pl.BlockSpec((b_pad, OUT_PAD), lambda k: (0, 0)),
            scratch_shapes=[pltpu.VMEM((b_pad, H1), jnp.float32)],
        ),
        compiler_params=pltpu.CompilerParams(
            dimension_semantics=("arbitrary",),
            vmem_limit_bytes=vmem_limit,
        ),
    )(x_p, w1_p, b1, w2, b2, w3_p, b3_p)

    return out[:b, :OUT]


def init_params(key):
    """Deterministic init mimicking PyTorch's default Linear init
    (uniform +/- 1/sqrt(fan_in)). Weights stored as (in, out); biases (1, out)."""
    ks = jax.random.split(key, 6)

    def lin(kw, kb, fan_in, fan_out):
        bound = 1.0 / jnp.sqrt(fan_in)
        w = jax.random.uniform(kw, (fan_in, fan_out), jnp.float32, -bound, bound)
        b = jax.random.uniform(kb, (1, fan_out), jnp.float32, -bound, bound)
        return w, b

    w1, b1 = lin(ks[0], ks[1], IN_DIM, H1)
    w2, b2 = lin(ks[2], ks[3], H1, H2)
    w3, b3 = lin(ks[4], ks[5], H2, OUT)
    return (w1, b1, w2, b2, w3, b3)


def _reference_forward(imagen, params):
    """Pure-JAX reference (layer 1 in bf16-in / f32-accum like the kernel)."""
    w1, b1, w2, b2, w3, b3 = params
    x = imagen.reshape(imagen.shape[0], -1)
    h = jnp.dot(x.astype(jnp.bfloat16), w1.astype(jnp.bfloat16),
                preferred_element_type=jnp.float32) + b1
    h = jnp.where(h > 0, h, 0.2 * h)
    h = h @ w2 + b2
    h = jnp.where(h > 0, h, 0.2 * h)
    h = h @ w3 + b3
    return jax.nn.sigmoid(h)


if __name__ == "__main__":
    key = jax.random.PRNGKey(0)
    k_img, k_params = jax.random.split(key)

    batch = 2
    imagen = jax.random.normal(k_img, (batch,) + IMG_SHAPE, dtype=jnp.float32)
    params = init_params(k_params)

    out = discriminador_forward(imagen, params)
    out = jax.block_until_ready(out)

    ref = _reference_forward(imagen, params)
    assert out.shape == (batch, 1), out.shape
    assert jnp.allclose(out, ref, atol=1e-4, rtol=1e-4), (out, ref)

    print("KERNEL_OK")
</pallas_src>

<mosaic_0001>
module attributes {stable_mosaic.version = 11 : i64} {
  func.func @_mlp_kernel(%arg0: i32, %arg1: memref<8x768xbf16, #tpu.memory_space<vmem>>, %arg2: memref<768x512xbf16, #tpu.memory_space<vmem>>, %arg3: memref<1x512xf32, #tpu.memory_space<vmem>>, %arg4: memref<512x256xf32, #tpu.memory_space<vmem>>, %arg5: memref<1x256xf32, #tpu.memory_space<vmem>>, %arg6: memref<256x128xf32, #tpu.memory_space<vmem>>, %arg7: memref<1x128xf32, #tpu.memory_space<vmem>>, %arg8: memref<8x128xf32, #tpu.memory_space<vmem>>, %arg9: memref<8x512xf32, #tpu.memory_space<vmem>>) attributes {dimension_semantics = [#tpu.dimension_semantics<arbitrary>], iteration_bounds = array<i64: 1>, scalar_prefetch = 0 : i64, scratch_operands = 1 : i64, tpu.core_type = #tpu.core_type<tc>, window_params = [{transform_indices = @transform_0, window_bounds = array<i64: 8, 768>}, {transform_indices = @transform_1, window_bounds = array<i64: 768, 512>}, {pipeline_mode = #tpu.pipeline_mode<synchronous>, transform_indices = @transform_2, window_bounds = array<i64: 1, 512>}, {pipeline_mode = #tpu.pipeline_mode<synchronous>, transform_indices = @transform_3, window_bounds = array<i64: 512, 256>}, {pipeline_mode = #tpu.pipeline_mode<synchronous>, transform_indices = @transform_4, window_bounds = array<i64: 1, 256>}, {pipeline_mode = #tpu.pipeline_mode<synchronous>, transform_indices = @transform_5, window_bounds = array<i64: 256, 128>}, {pipeline_mode = #tpu.pipeline_mode<synchronous>, transform_indices = @transform_6, window_bounds = array<i64: 1, 128>}, {pipeline_mode = #tpu.pipeline_mode<synchronous>, transform_indices = @transform_7, window_bounds = array<i64: 8, 128>}]} {
    %c0_i32 = arith.constant 0 : i32
    %0 = arith.cmpi eq, %arg0, %c0_i32 : i32
    %1 = arith.extui %0 : i1 to i32
    %c0_i32_0 = arith.constant 0 : i32
    %2 = arith.cmpi ne, %1, %c0_i32_0 : i32
    scf.if %2 {
      %cst_10 = arith.constant 0.000000e+00 : f32
      %12 = vector.broadcast %cst_10 : f32 to vector<8x512xf32>
      %c0_11 = arith.constant 0 : index
      %c0_12 = arith.constant 0 : index
      %13 = vector.load %arg9[%c0_11, %c0_12] : memref<8x512xf32, #tpu.memory_space<vmem>>, vector<8x512xf32>
      tpu.vector_store %arg9[%c0_11, %c0_12], %12 {strides = array<i32>} : memref<8x512xf32, #tpu.memory_space<vmem>>, vector<8x512xf32>,
    } else {
    }
    %c0 = arith.constant 0 : index
    %c0_1 = arith.constant 0 : index
    %3 = vector.load %arg9[%c0, %c0_1] : memref<8x512xf32, #tpu.memory_space<vmem>>, vector<8x512xf32>
    %c0_2 = arith.constant 0 : index
    %c0_3 = arith.constant 0 : index
    %4 = vector.load %arg1[%c0_2, %c0_3] : memref<8x768xbf16, #tpu.memory_space<vmem>>, vector<8x768xbf16>
    %c0_4 = arith.constant 0 : index
    %c0_5 = arith.constant 0 : index
    %5 = vector.load %arg2[%c0_4, %c0_5] : memref<768x512xbf16, #tpu.memory_space<vmem>>, vector<768x512xbf16>
    %cst = arith.constant dense<0.000000e+00> : vector<8x512xf32>
    %6 = tpu.matmul %4, %5, %cst {dimension_numbers = #tpu.dot_dimension_numbers<[1], [0], [0], [1], [0, 0, 1, 1], [], []>} : vector<8x768xbf16>, vector<768x512xbf16>, vector<8x512xf32> -> vector<8x512xf32>
    %7 = arith.addf %3, %6 : vector<8x512xf32>
    %c0_6 = arith.constant 0 : index
    %c0_7 = arith.constant 0 : index
    %8 = vector.load %arg9[%c0_6, %c0_7] : memref<8x512xf32, #tpu.memory_space<vmem>>, vector<8x512xf32>
    tpu.vector_store %arg9[%c0_6, %c0_7], %7 {strides = array<i32>} : memref<8x512xf32, #tpu.memory_space<vmem>>, vector<8x512xf32>,
    %c0_i32_8 = arith.constant 0 : i32
    %9 = arith.cmpi eq, %arg0, %c0_i32_8 : i32
    %10 = arith.extui %9 : i1 to i32
    %c0_i32_9 = arith.constant 0 : i32
    %11 = arith.cmpi ne, %10, %c0_i32_9 : i32
    scf.if %11 {
      %c0_10 = arith.constant 0 : index
      %c0_11 = arith.constant 0 : index
      %12 = vector.load %arg9[%c0_10, %c0_11] : memref<8x512xf32, #tpu.memory_space<vmem>>, vector<8x512xf32>
      %c0_12 = arith.constant 0 : index
      %c0_13 = arith.constant 0 : index
      %13 = vector.load %arg3[%c0_12, %c0_13] : memref<1x512xf32, #tpu.memory_space<vmem>>, vector<1x512xf32>
      %14 = vector.broadcast %13 : vector<1x512xf32> to vector<8x512xf32>
      %15 = arith.addf %12, %14 : vector<8x512xf32>
      %cst_14 = arith.constant 0.000000e+00 : f32
      %16 = vector.broadcast %cst_14 : f32 to vector<8x512xf32>
      %17 = arith.cmpf ogt, %15, %16 : vector<8x512xf32>
      %cst_15 = arith.constant 2.000000e-01 : f32
      %18 = vector.broadcast %cst_15 : f32 to vector<8x512xf32>
      %19 = arith.mulf %18, %15 : vector<8x512xf32>
      %20 = arith.select %17, %15, %19 : vector<8x512xi1>, vector<8x512xf32>
      %c0_16 = arith.constant 0 : index
      %c0_17 = arith.constant 0 : index
      %21 = vector.load %arg4[%c0_16, %c0_17] : memref<512x256xf32, #tpu.memory_space<vmem>>, vector<512x256xf32>
      %cst_18 = arith.constant dense<0.000000e+00> : vector<8x256xf32>
      %22 = tpu.matmul %20, %21, %cst_18 {dimension_numbers = #tpu.dot_dimension_numbers<[1], [0], [0], [1], [0, 0, 1, 1], [], []>} : vector<8x512xf32>, vector<512x256xf32>, vector<8x256xf32> -> vector<8x256xf32>
      %c0_19 = arith.constant 0 : index
      %c0_20 = arith.constant 0 : index
      %23 = vector.load %arg5[%c0_19, %c0_20] : memref<1x256xf32, #tpu.memory_space<vmem>>, vector<1x256xf32>
      %24 = vector.broadcast %23 : vector<1x256xf32> to vector<8x256xf32>
      %25 = arith.addf %22, %24 : vector<8x256xf32>
      %cst_21 = arith.constant 0.000000e+00 : f32
      %26 = vector.broadcast %cst_21 : f32 to vector<8x256xf32>
      %27 = arith.cmpf ogt, %25, %26 : vector<8x256xf32>
      %cst_22 = arith.constant 2.000000e-01 : f32
      %28 = vector.broadcast %cst_22 : f32 to vector<8x256xf32>
      %29 = arith.mulf %28, %25 : vector<8x256xf32>
      %30 = arith.select %27, %25, %29 : vector<8x256xi1>, vector<8x256xf32>
      %c0_23 = arith.constant 0 : index
      %c0_24 = arith.constant 0 : index
      %31 = vector.load %arg6[%c0_23, %c0_24] : memref<256x128xf32, #tpu.memory_space<vmem>>, vector<256x128xf32>
      %cst_25 = arith.constant dense<0.000000e+00> : vector<8x128xf32>
      %32 = tpu.matmul %30, %31, %cst_25 {dimension_numbers = #tpu.dot_dimension_numbers<[1], [0], [0], [1], [0, 0, 1, 1], [], []>} : vector<8x256xf32>, vector<256x128xf32>, vector<8x128xf32> -> vector<8x128xf32>
      %c0_26 = arith.constant 0 : index
      %c0_27 = arith.constant 0 : index
      %33 = vector.load %arg7[%c0_26, %c0_27] : memref<1x128xf32, #tpu.memory_space<vmem>>, vector<1x128xf32>
      %34 = vector.broadcast %33 : vector<1x128xf32> to vector<8x128xf32>
      %35 = arith.addf %32, %34 : vector<8x128xf32>
      %cst_28 = arith.constant 0.000000e+00 : f32
      %36 = vector.broadcast %cst_28 : f32 to vector<8x128xf32>
      %37 = arith.subf %36, %35 : vector<8x128xf32>
      %38 = math.exp %37 : vector<8x128xf32>
      %cst_29 = arith.constant 1.000000e+00 : f32
      %39 = vector.broadcast %cst_29 : f32 to vector<8x128xf32>
      %40 = arith.addf %39, %38 : vector<8x128xf32>
      %cst_30 = arith.constant 1.000000e+00 : f32
      %41 = vector.broadcast %cst_30 : f32 to vector<8x128xf32>
      %42 = arith.divf %41, %40 : vector<8x128xf32>
      %c0_31 = arith.constant 0 : index
      %c0_32 = arith.constant 0 : index
      %43 = vector.load %arg8[%c0_31, %c0_32] : memref<8x128xf32, #tpu.memory_space<vmem>>, vector<8x128xf32>
      tpu.vector_store %arg8[%c0_31, %c0_32], %42 {strides = array<i32>} : memref<8x128xf32, #tpu.memory_space<vmem>>, vector<8x128xf32>,
    } else {
    }
    return
  }
  func.func @transform_0(%arg0: i32) -> (i32, i32) {
    %c0_i32 = arith.constant 0 : i32
    %c0_i32_0 = arith.constant 0 : i32
    return %c0_i32, %arg0 : i32, i32
  }
  func.func @transform_1(%arg0: i32) -> (i32, i32) {
    %c0_i32 = arith.constant 0 : i32
    %c0_i32_0 = arith.constant 0 : i32
    return %arg0, %c0_i32 : i32, i32
  }
  func.func @transform_2(%arg0: i32) -> (i32, i32) {
    %c0_i32 = arith.constant 0 : i32
    %c0_i32_0 = arith.constant 0 : i32
    %c0_i32_1 = arith.constant 0 : i32
    return %c0_i32, %c0_i32_0 : i32, i32
  }
  func.func @transform_3(%arg0: i32) -> (i32, i32) {
    %c0_i32 = arith.constant 0 : i32
    %c0_i32_0 = arith.constant 0 : i32
    %c0_i32_1 = arith.constant 0 : i32
    return %c0_i32, %c0_i32_0 : i32, i32
  }
  func.func @transform_4(%arg0: i32) -> (i32, i32) {
    %c0_i32 = arith.constant 0 : i32
    %c0_i32_0 = arith.constant 0 : i32
    %c0_i32_1 = arith.constant 0 : i32
    return %c0_i32, %c0_i32_0 : i32, i32
  }
  func.func @transform_5(%arg0: i32) -> (i32, i32) {
    %c0_i32 = arith.constant 0 : i32
    %c0_i32_0 = arith.constant 0 : i32
    %c0_i32_1 = arith.constant 0 : i32
    return %c0_i32, %c0_i32_0 : i32, i32
  }
  func.func @transform_6(%arg0: i32) -> (i32, i32) {
    %c0_i32 = arith.constant 0 : i32
    %c0_i32_0 = arith.constant 0 : i32
    %c0_i32_1 = arith.constant 0 : i32
    return %c0_i32, %c0_i32_0 : i32, i32
  }
  func.func @transform_7(%arg0: i32) -> (i32, i32) {
    %c0_i32 = arith.constant 0 : i32
    %c0_i32_0 = arith.constant 0 : i32
    %c0_i32_1 = arith.constant 0 : i32
    return %c0_i32, %c0_i32_0 : i32, i32
  }
}

</mosaic_0001>

<llo_original>
// kernel: discriminador_forward.1
$region0: #{discriminador_forward.1}
  #allocation0 [shape = 'u32[]', space=smem, size = 0x4, offset = 0x4, fixed_abs, tag = 'smem constant byte address 0x4 - core index']
  #allocation1 [shape = 'u32[144,128]{1,0:T(1,128)}', space=vmem, size = 0x12000, scoped, tag = 'internal scratch']
  #allocation2 [shape = 'f32[8,512]{1,0:T(8,128)}', space=vmem, size = 0x4000, scoped, tag = 'scratch operand']
  %s0 = inlined_call_operand.vmem [shape: bf16[8,768], index: 0, kind: input, shape index: {}]
  %s1 = inlined_call_operand.vmem [shape: bf16[768,512], index: 1, kind: input, shape index: {}]
  %s2 = inlined_call_operand.vmem [shape: f32[1,512], index: 2, kind: input, shape index: {}]
  %s3 = inlined_call_operand.vmem [shape: f32[512,256], index: 3, kind: input, shape index: {}]
  %s4 = inlined_call_operand.vmem [shape: f32[1,256], index: 4, kind: input, shape index: {}]
  %s5 = inlined_call_operand.vmem [shape: f32[256,128], index: 5, kind: input, shape index: {}]
  %s6 = inlined_call_operand.vmem [shape: f32[1,128], index: 6, kind: input, shape index: {}]
  %s7 = inlined_call_operand.vmem [shape: f32[8,128], index: 7, kind: output, shape index: {}]
  %s8 = sld [smem:[#allocation0]]
  $region46: #{discriminador_forward.1} parent=0
    _
  %s10 = ssub.s32 1, %s8
  %s11 = scalar_select 0, %s10, %s8
  // Predicated region
  $region2: #{discriminador_forward.1} parent=0 // pred_check
    _
  $region3: #{discriminador_forward.1} parent=0 // pred_check_branch
    %13 = sbr.rel (0) target = $region5
  $region4: #{discriminador_forward.1} parent=0 // pred_region
    _
  $region5: #{discriminador_forward.1} parent=0 // pred_fallthru
    _
  // Predicated region
  $region6: #{discriminador_forward.1} parent=0 // pred_check
    _
  $region7: #{discriminador_forward.1} parent=0 // pred_check_branch
    %15 = sbr.rel (0) target = $region9
  $region8: #{discriminador_forward.1} parent=0 // pred_region
    _
  $region9: #{discriminador_forward.1} parent=0 // pred_fallthru
    _
  // Predicated region
  $region10: #{discriminador_forward.1} parent=0 // pred_check
    _
  $region11: #{discriminador_forward.1} parent=0 // pred_check_branch
    %17 = sbr.rel (0) target = $region13
  $region12: #{discriminador_forward.1} parent=0 // pred_region
    _
  $region13: #{discriminador_forward.1} parent=0 // pred_fallthru
    _
  // Predicated region
  $region14: #{discriminador_forward.1} parent=0 // pred_check
    _
  $region15: #{discriminador_forward.1} parent=0 // pred_check_branch
    %19 = sbr.rel (0) target = $region17
  $region16: #{discriminador_forward.1} parent=0 // pred_region
    _
  $region17: #{discriminador_forward.1} parent=0 // pred_fallthru
    _
  // Predicated region
  $region18: #{discriminador_forward.1} parent=0 // pred_check
    _
  $region19: #{discriminador_forward.1} parent=0 // pred_check_branch
    %21 = sbr.rel (0) target = $region21
  $region20: #{discriminador_forward.1} parent=0 // pred_region
    _
  $region21: #{discriminador_forward.1} parent=0 // pred_fallthru
    _
  // Predicated region
  $region22: #{discriminador_forward.1} parent=0 // pred_check
    _
  $region23: #{discriminador_forward.1} parent=0 // pred_check_branch
    %23 = sbr.rel (0) target = $region25
  $region24: #{discriminador_forward.1} parent=0 // pred_region
    _
  $region25: #{discriminador_forward.1} parent=0 // pred_fallthru
    _
  // Predicated region
  $region26: #{discriminador_forward.1} parent=0 // pred_check
    _
  $region27: #{discriminador_forward.1} parent=0 // pred_check_branch
    %25 = sbr.rel (0) target = $region29
  $region28: #{discriminador_forward.1} parent=0 // pred_region
    _
  $region29: #{discriminador_forward.1} parent=0 // pred_fallthru
    _
  %p26 = scmp.eq.s32.totalorder 0, 0
  // Predicated region
  $region30: #{discriminador_forward.1} parent=0 // pred_check
    %p27 = pneg %p26
  $region31: #{discriminador_forward.1} parent=0 // pred_check_branch
    %29 = sbr.rel (%p27) target = $region33
  $region32: #{discriminador_forward.1} parent=0 // pred_region
    %30 = vst [vmem:[#allocation2] sm:$0xff] 0.0
    %31 = vst [vmem:[#allocation2 + $0x8] sm:$0xff] 0.0
    %32 = vst [vmem:[#allocation2 + $0x10] sm:$0xff] 0.0
    %33 = vst [vmem:[#allocation2 + $0x18] sm:$0xff] 0.0
  $region33: #{discriminador_forward.1} parent=0 // pred_fallthru
    _
  %v34 = vld [vmem:[#allocation2] sm:$0xff]
  %v35 = vld [vmem:[#allocation2 + $0x8] sm:$0xff]
  %v36 = vld [vmem:[#allocation2 + $0x10] sm:$0xff]
  %v37 = vld [vmem:[#allocation2 + $0x18] sm:$0xff]
  %v38 = vld [vmem:[%s0] sm:$0xff]
  %v39 = vld [vmem:[%s0 + $0x8] sm:$0xff]
  %v40 = vld [vmem:[%s0 + $0x10] sm:$0xff]
  %v41 = vld [vmem:[%s1] sm:$0xff]
  %v42 = vld [vmem:[%s1 + $0x8] sm:$0xff]
  %v43 = vld [vmem:[%s1 + $0x10] sm:$0xff]
  %v44 = vld [vmem:[%s1 + $0x18] sm:$0xff]
  %v45 = vld [vmem:[%s1 + $0x20] sm:$0xff]
  %v46 = vld [vmem:[%s1 + $0x28] sm:$0xff]
  %v47 = vld [vmem:[%s1 + $0x30] sm:$0xff]
  %v48 = vld [vmem:[%s1 + $0x38] sm:$0xff]
  %v49 = vld [vmem:[%s1 + $0x40] sm:$0xff]
  %v50 = vld [vmem:[%s1 + $0x48] sm:$0xff]
  %v51 = vld [vmem:[%s1 + $0x50] sm:$0xff]
  %v52 = vld [vmem:[%s1 + $0x58] sm:$0xff]
  %v53 = vld [vmem:[%s1 + $0x60] sm:$0xff]
  %v54 = vld [vmem:[%s1 + $0x68] sm:$0xff]
  %v55 = vld [vmem:[%s1 + $0x70] sm:$0xff]
  %v56 = vld [vmem:[%s1 + $0x78] sm:$0xff]
  %v57 = vld [vmem:[%s1 + $0x80] sm:$0xff]
  %v58 = vld [vmem:[%s1 + $0x88] sm:$0xff]
  %v59 = vld [vmem:[%s1 + $0x90] sm:$0xff]
  %v60 = vld [vmem:[%s1 + $0x98] sm:$0xff]
  %v61 = vld [vmem:[%s1 + $0xa0] sm:$0xff]
  %v62 = vld [vmem:[%s1 + $0xa8] sm:$0xff]
  %v63 = vld [vmem:[%s1 + $0xb0] sm:$0xff]
  %v64 = vld [vmem:[%s1 + $0xb8] sm:$0xff]
  %v65 = vld [vmem:[%s1 + $0xc0] sm:$0xff]
  %v66 = vld [vmem:[%s1 + $0xc8] sm:$0xff]
  %v67 = vld [vmem:[%s1 + $0xd0] sm:$0xff]
  %v68 = vld [vmem:[%s1 + $0xd8] sm:$0xff]
  %v69 = vld [vmem:[%s1 + $0xe0] sm:$0xff]
  %v70 = vld [vmem:[%s1 + $0xe8] sm:$0xff]
  %v71 = vld [vmem:[%s1 + $0xf0] sm:$0xff]
  %v72 = vld [vmem:[%s1 + $0xf8] sm:$0xff]
  %v73 = vld [vmem:[%s1 + $0x100] sm:$0xff]
  %v74 = vld [vmem:[%s1 + $0x108] sm:$0xff]
  %v75 = vld [vmem:[%s1 + $0x110] sm:$0xff]
  %v76 = vld [vmem:[%s1 + $0x118] sm:$0xff]
  %v77 = vld [vmem:[%s1 + $0x120] sm:$0xff]
  %v78 = vld [vmem:[%s1 + $0x128] sm:$0xff]
  %v79 = vld [vmem:[%s1 + $0x130] sm:$0xff]
  %v80 = vld [vmem:[%s1 + $0x138] sm:$0xff]
  %v81 = vld [vmem:[%s1 + $0x140] sm:$0xff]
  %v82 = vld [vmem:[%s1 + $0x148] sm:$0xff]
  %v83 = vld [vmem:[%s1 + $0x150] sm:$0xff]
  %v84 = vld [vmem:[%s1 + $0x158] sm:$0xff]
  %v85 = vld [vmem:[%s1 + $0x160] sm:$0xff]
  %v86 = vld [vmem:[%s1 + $0x168] sm:$0xff]
  %v87 = vld [vmem:[%s1 + $0x170] sm:$0xff]
  %v88 = vld [vmem:[%s1 + $0x178] sm:$0xff]
  %v89 = vld [vmem:[%s1 + $0x180] sm:$0xff]
  %v90 = vld [vmem:[%s1 + $0x188] sm:$0xff]
  %v91 = vld [vmem:[%s1 + $0x190] sm:$0xff]
  %v92 = vld [vmem:[%s1 + $0x198] sm:$0xff]
  %v93 = vld [vmem:[%s1 + $0x1a0] sm:$0xff]
  %v94 = vld [vmem:[%s1 + $0x1a8] sm:$0xff]
  %v95 = vld [vmem:[%s1 + $0x1b0] sm:$0xff]
  %v96 = vld [vmem:[%s1 + $0x1b8] sm:$0xff]
  %v97 = vld [vmem:[%s1 + $0x1c0] sm:$0xff]
  %v98 = vld [vmem:[%s1 + $0x1c8] sm:$0xff]
  %v99 = vld [vmem:[%s1 + $0x1d0] sm:$0xff]
  %v100 = vld [vmem:[%s1 + $0x1d8] sm:$0xff]
  %v101 = vld [vmem:[%s1 + $0x1e0] sm:$0xff]
  %v102 = vld [vmem:[%s1 + $0x1e8] sm:$0xff]
  %v103 = vld [vmem:[%s1 + $0x1f0] sm:$0xff]
  %v104 = vld [vmem:[%s1 + $0x1f8] sm:$0xff]
  %v105 = vld [vmem:[%s1 + $0x200] sm:$0xff]
  %v106 = vld [vmem:[%s1 + $0x208] sm:$0xff]
  %v107 = vld [vmem:[%s1 + $0x210] sm:$0xff]
  %v108 = vld [vmem:[%s1 + $0x218] sm:$0xff]
  %v109 = vld [vmem:[%s1 + $0x220] sm:$0xff]
  %v110 = vld [vmem:[%s1 + $0x228] sm:$0xff]
  %v111 = vld [vmem:[%s1 + $0x230] sm:$0xff]
  %v112 = vld [vmem:[%s1 + $0x238] sm:$0xff]
  %v113 = vld [vmem:[%s1 + $0x240] sm:$0xff]
  %v114 = vld [vmem:[%s1 + $0x248] sm:$0xff]
  %v115 = vld [vmem:[%s1 + $0x250] sm:$0xff]
  %v116 = vld [vmem:[%s1 + $0x258] sm:$0xff]
  %v117 = vld [vmem:[%s1 + $0x260] sm:$0xff]
  %v118 = vld [vmem:[%s1 + $0x268] sm:$0xff]
  %v119 = vld [vmem:[%s1 + $0x270] sm:$0xff]
  %v120 = vld [vmem:[%s1 + $0x278] sm:$0xff]
  %v121 = vld [vmem:[%s1 + $0x280] sm:$0xff]
  %v122 = vld [vmem:[%s1 + $0x288] sm:$0xff]
  %v123 = vld [vmem:[%s1 + $0x290] sm:$0xff]
  %v124 = vld [vmem:[%s1 + $0x298] sm:$0xff]
  %v125 = vld [vmem:[%s1 + $0x2a0] sm:$0xff]
  %v126 = vld [vmem:[%s1 + $0x2a8] sm:$0xff]
  %v127 = vld [vmem:[%s1 + $0x2b0] sm:$0xff]
  %v128 = vld [vmem:[%s1 + $0x2b8] sm:$0xff]
  %v129 = vld [vmem:[%s1 + $0x2c0] sm:$0xff]
  %v130 = vld [vmem:[%s1 + $0x2c8] sm:$0xff]
  %v131 = vld [vmem:[%s1 + $0x2d0] sm:$0xff]
  %v132 = vld [vmem:[%s1 + $0x2d8] sm:$0xff]
  %v133 = vld [vmem:[%s1 + $0x2e0] sm:$0xff]
  %v134 = vld [vmem:[%s1 + $0x2e8] sm:$0xff]
  %v135 = vld [vmem:[%s1 + $0x2f0] sm:$0xff]
  %v136 = vld [vmem:[%s1 + $0x2f8] sm:$0xff]
  %v137 = vld [vmem:[%s1 + $0x300] sm:$0xff]
  %v138 = vld [vmem:[%s1 + $0x308] sm:$0xff]
  %v139 = vld [vmem:[%s1 + $0x310] sm:$0xff]
  %v140 = vld [vmem:[%s1 + $0x318] sm:$0xff]
  %v141 = vld [vmem:[%s1 + $0x320] sm:$0xff]
  %v142 = vld [vmem:[%s1 + $0x328] sm:$0xff]
  %v143 = vld [vmem:[%s1 + $0x330] sm:$0xff]
  %v144 = vld [vmem:[%s1 + $0x338] sm:$0xff]
  %v145 = vld [vmem:[%s1 + $0x340] sm:$0xff]
  %v146 = vld [vmem:[%s1 + $0x348] sm:$0xff]
  %v147 = vld [vmem:[%s1 + $0x350] sm:$0xff]
  %v148 = vld [vmem:[%s1 + $0x358] sm:$0xff]
  %v149 = vld [vmem:[%s1 + $0x360] sm:$0xff]
  %v150 = vld [vmem:[%s1 + $0x368] sm:$0xff]
  %v151 = vld [vmem:[%s1 + $0x370] sm:$0xff]
  %v152 = vld [vmem:[%s1 + $0x378] sm:$0xff]
  %v153 = vld [vmem:[%s1 + $0x380] sm:$0xff]
  %v154 = vld [vmem:[%s1 + $0x388] sm:$0xff]
  %v155 = vld [vmem:[%s1 + $0x390] sm:$0xff]
  %v156 = vld [vmem:[%s1 + $0x398] sm:$0xff]
  %v157 = vld [vmem:[%s1 + $0x3a0] sm:$0xff]
  %v158 = vld [vmem:[%s1 + $0x3a8] sm:$0xff]
  %v159 = vld [vmem:[%s1 + $0x3b0] sm:$0xff]
  %v160 = vld [vmem:[%s1 + $0x3b8] sm:$0xff]
  %v161 = vld [vmem:[%s1 + $0x3c0] sm:$0xff]
  %v162 = vld [vmem:[%s1 + $0x3c8] sm:$0xff]
  %v163 = vld [vmem:[%s1 + $0x3d0] sm:$0xff]
  %v164 = vld [vmem:[%s1 + $0x3d8] sm:$0xff]
  %v165 = vld [vmem:[%s1 + $0x3e0] sm:$0xff]
  %v166 = vld [vmem:[%s1 + $0x3e8] sm:$0xff]
  %v167 = vld [vmem:[%s1 + $0x3f0] sm:$0xff]
  %v168 = vld [vmem:[%s1 + $0x3f8] sm:$0xff]
  %v169 = vld [vmem:[%s1 + $0x400] sm:$0xff]
  %v170 = vld [vmem:[%s1 + $0x408] sm:$0xff]
  %v171 = vld [vmem:[%s1 + $0x410] sm:$0xff]
  %v172 = vld [vmem:[%s1 + $0x418] sm:$0xff]
  %v173 = vld [vmem:[%s1 + $0x420] sm:$0xff]
  %v174 = vld [vmem:[%s1 + $0x428] sm:$0xff]
  %v175 = vld [vmem:[%s1 + $0x430] sm:$0xff]
  %v176 = vld [vmem:[%s1 + $0x438] sm:$0xff]
  %v177 = vld [vmem:[%s1 + $0x440] sm:$0xff]
  %v178 = vld [vmem:[%s1 + $0x448] sm:$0xff]
  %v179 = vld [vmem:[%s1 + $0x450] sm:$0xff]
  %v180 = vld [vmem:[%s1 + $0x458] sm:$0xff]
  %v181 = vld [vmem:[%s1 + $0x460] sm:$0xff]
  %v182 = vld [vmem:[%s1 + $0x468] sm:$0xff]
  %v183 = vld [vmem:[%s1 + $0x470] sm:$0xff]
  %v184 = vld [vmem:[%s1 + $0x478] sm:$0xff]
  %v185 = vld [vmem:[%s1 + $0x480] sm:$0xff]
  %v186 = vld [vmem:[%s1 + $0x488] sm:$0xff]
  %v187 = vld [vmem:[%s1 + $0x490] sm:$0xff]
  %v188 = vld [vmem:[%s1 + $0x498] sm:$0xff]
  %v189 = vld [vmem:[%s1 + $0x4a0] sm:$0xff]
  %v190 = vld [vmem:[%s1 + $0x4a8] sm:$0xff]
  %v191 = vld [vmem:[%s1 + $0x4b0] sm:$0xff]
  %v192 = vld [vmem:[%s1 + $0x4b8] sm:$0xff]
  %v193 = vld [vmem:[%s1 + $0x4c0] sm:$0xff]
  %v194 = vld [vmem:[%s1 + $0x4c8] sm:$0xff]
  %v195 = vld [vmem:[%s1 + $0x4d0] sm:$0xff]
  %v196 = vld [vmem:[%s1 + $0x4d8] sm:$0xff]
  %v197 = vld [vmem:[%s1 + $0x4e0] sm:$0xff]
  %v198 = vld [vmem:[%s1 + $0x4e8] sm:$0xff]
  %v199 = vld [vmem:[%s1 + $0x4f0] sm:$0xff]
  %v200 = vld [vmem:[%s1 + $0x4f8] sm:$0xff]
  %v201 = vld [vmem:[%s1 + $0x500] sm:$0xff]
  %v202 = vld [vmem:[%s1 + $0x508] sm:$0xff]
  %v203 = vld [vmem:[%s1 + $0x510] sm:$0xff]
  %v204 = vld [vmem:[%s1 + $0x518] sm:$0xff]
  %v205 = vld [vmem:[%s1 + $0x520] sm:$0xff]
  %v206 = vld [vmem:[%s1 + $0x528] sm:$0xff]
  %v207 = vld [vmem:[%s1 + $0x530] sm:$0xff]
  %v208 = vld [vmem:[%s1 + $0x538] sm:$0xff]
  %v209 = vld [vmem:[%s1 + $0x540] sm:$0xff]
  %v210 = vld [vmem:[%s1 + $0x548] sm:$0xff]
  %v211 = vld [vmem:[%s1 + $0x550] sm:$0xff]
  %v212 = vld [vmem:[%s1 + $0x558] sm:$0xff]
  %v213 = vld [vmem:[%s1 + $0x560] sm:$0xff]
  %v214 = vld [vmem:[%s1 + $0x568] sm:$0xff]
  %v215 = vld [vmem:[%s1 + $0x570] sm:$0xff]
  %v216 = vld [vmem:[%s1 + $0x578] sm:$0xff]
  %v217 = vld [vmem:[%s1 + $0x580] sm:$0xff]
  %v218 = vld [vmem:[%s1 + $0x588] sm:$0xff]
  %v219 = vld [vmem:[%s1 + $0x590] sm:$0xff]
  %v220 = vld [vmem:[%s1 + $0x598] sm:$0xff]
  %v221 = vld [vmem:[%s1 + $0x5a0] sm:$0xff]
  %v222 = vld [vmem:[%s1 + $0x5a8] sm:$0xff]
  %v223 = vld [vmem:[%s1 + $0x5b0] sm:$0xff]
  %v224 = vld [vmem:[%s1 + $0x5b8] sm:$0xff]
  %v225 = vld [vmem:[%s1 + $0x5c0] sm:$0xff]
  %v226 = vld [vmem:[%s1 + $0x5c8] sm:$0xff]
  %v227 = vld [vmem:[%s1 + $0x5d0] sm:$0xff]
  %v228 = vld [vmem:[%s1 + $0x5d8] sm:$0xff]
  %v229 = vld [vmem:[%s1 + $0x5e0] sm:$0xff]
  %v230 = vld [vmem:[%s1 + $0x5e8] sm:$0xff]
  %v231 = vld [vmem:[%s1 + $0x5f0] sm:$0xff]
  %v232 = vld [vmem:[%s1 + $0x5f8] sm:$0xff]
  %v236 = vunpack.c.l.b16 %v38
  %v237 = vunpack.c.h.b16 %v38
  %v238 = vunpack.c.l.b16 %v39
  %v239 = vunpack.c.h.b16 %v39
  %v240 = vunpack.c.l.b16 %v40
  %v241 = vunpack.c.h.b16 %v40
  %v242 = vpack.c.b16 %v236, %v236
  %v243 = vpack.c.b16 %v237, %v237
  %v244 = vpack.c.b16 %v238, %v238
  %v245 = vpack.c.b16 %v239, %v239
  %v246 = vpack.c.b16 %v240, %v240
  %v247 = vpack.c.b16 %v241, %v241
  %v446 = vunpack.c.l.b16 %v41
  %v447 = vunpack.c.h.b16 %v41
  %v448 = vunpack.c.l.b16 %v42
  %v449 = vunpack.c.h.b16 %v42
  %v450 = vunpack.c.l.b16 %v43
  %v451 = vunpack.c.h.b16 %v43
  %v452 = vunpack.c.l.b16 %v44
  %v453 = vunpack.c.h.b16 %v44
  %v454 = vunpack.c.l.b16 %v45
  %v455 = vunpack.c.h.b16 %v45
  %v456 = vunpack.c.l.b16 %v46
  %v457 = vunpack.c.h.b16 %v46
  %v458 = vunpack.c.l.b16 %v47
  %v459 = vunpack.c.h.b16 %v47
  %v460 = vunpack.c.l.b16 %v48
  %v461 = vunpack.c.h.b16 %v48
  %v462 = vunpack.c.l.b16 %v49
  %v463 = vunpack.c.h.b16 %v49
  %v464 = vunpack.c.l.b16 %v50
  %v465 = vunpack.c.h.b16 %v50
  %v466 = vunpack.c.l.b16 %v51
  %v467 = vunpack.c.h.b16 %v51
  %v468 = vunpack.c.l.b16 %v52
  %v469 = vunpack.c.h.b16 %v52
  %v470 = vunpack.c.l.b16 %v53
  %v471 = vunpack.c.h.b16 %v53
  %v472 = vunpack.c.l.b16 %v54
  %v473 = vunpack.c.h.b16 %v54
  %v474 = vunpack.c.l.b16 %v55
  %v475 = vunpack.c.h.b16 %v55
  %v476 = vunpack.c.l.b16 %v56
  %v477 = vunpack.c.h.b16 %v56
  %v478 = vunpack.c.l.b16 %v57
  %v479 = vunpack.c.h.b16 %v57
  %v480 = vunpack.c.l.b16 %v58
  %v481 = vunpack.c.h.b16 %v58
  %v482 = vunpack.c.l.b16 %v59
  %v483 = vunpack.c.h.b16 %v59
  %v484 = vunpack.c.l.b16 %v60
  %v485 = vunpack.c.h.b16 %v60
  %v486 = vunpack.c.l.b16 %v61
  %v487 = vunpack.c.h.b16 %v61
  %v488 = vunpack.c.l.b16 %v62
  %v489 = vunpack.c.h.b16 %v62
  %v490 = vunpack.c.l.b16 %v63
  %v491 = vunpack.c.h.b16 %v63
  %v492 = vunpack.c.l.b16 %v64
  %v493 = vunpack.c.h.b16 %v64
  %v494 = vunpack.c.l.b16 %v65
  %v495 = vunpack.c.h.b16 %v65
  %v496 = vunpack.c.l.b16 %v66
  %v497 = vunpack.c.h.b16 %v66
  %v498 = vunpack.c.l.b16 %v67
  %v499 = vunpack.c.h.b16 %v67
  %v500 = vunpack.c.l.b16 %v68
  %v501 = vunpack.c.h.b16 %v68
  %v502 = vunpack.c.l.b16 %v69
  %v503 = vunpack.c.h.b16 %v69
  %v504 = vunpack.c.l.b16 %v70
  %v505 = vunpack.c.h.b16 %v70
  %v506 = vunpack.c.l.b16 %v71
  %v507 = vunpack.c.h.b16 %v71
  %v508 = vunpack.c.l.b16 %v72
  %v509 = vunpack.c.h.b16 %v72
  %v510 = vunpack.c.l.b16 %v73
  %v511 = vunpack.c.h.b16 %v73
  %v512 = vunpack.c.l.b16 %v74
  %v513 = vunpack.c.h.b16 %v74
  %v514 = vunpack.c.l.b16 %v75
  %v515 = vunpack.c.h.b16 %v75
  %v516 = vunpack.c.l.b16 %v76
  %v517 = vunpack.c.h.b16 %v76
  %v518 = vunpack.c.l.b16 %v77
  %v519 = vunpack.c.h.b16 %v77
  %v520 = vunpack.c.l.b16 %v78
  %v521 = vunpack.c.h.b16 %v78
  %v522 = vunpack.c.l.b16 %v79
  %v523 = vunpack.c.h.b16 %v79
  %v524 = vunpack.c.l.b16 %v80
  %v525 = vunpack.c.h.b16 %v80
  %v526 = vunpack.c.l.b16 %v81
  %v527 = vunpack.c.h.b16 %v81
  %v528 = vunpack.c.l.b16 %v82
  %v529 = vunpack.c.h.b16 %v82
  %v530 = vunpack.c.l.b16 %v83
  %v531 = vunpack.c.h.b16 %v83
  %v532 = vunpack.c.l.b16 %v84
  %v533 = vunpack.c.h.b16 %v84
  %v534 = vunpack.c.l.b16 %v85
  %v535 = vunpack.c.h.b16 %v85
  %v536 = vunpack.c.l.b16 %v86
  %v537 = vunpack.c.h.b16 %v86
  %v538 = vunpack.c.l.b16 %v87
  %v539 = vunpack.c.h.b16 %v87
  %v540 = vunpack.c.l.b16 %v88
  %v541 = vunpack.c.h.b16 %v88
  %v542 = vunpack.c.l.b16 %v89
  %v543 = vunpack.c.h.b16 %v89
  %v544 = vunpack.c.l.b16 %v90
  %v545 = vunpack.c.h.b16 %v90
  %v546 = vunpack.c.l.b16 %v91
  %v547 = vunpack.c.h.b16 %v91
  %v548 = vunpack.c.l.b16 %v92
  %v549 = vunpack.c.h.b16 %v92
  %v550 = vunpack.c.l.b16 %v93
  %v551 = vunpack.c.h.b16 %v93
  %v552 = vunpack.c.l.b16 %v94
  %v553 = vunpack.c.h.b16 %v94
  %v554 = vunpack.c.l.b16 %v95
  %v555 = vunpack.c.h.b16 %v95
  %v556 = vunpack.c.l.b16 %v96
  %v557 = vunpack.c.h.b16 %v96
  %v558 = vunpack.c.l.b16 %v97
  %v559 = vunpack.c.h.b16 %v97
  %v560 = vunpack.c.l.b16 %v98
  %v561 = vunpack.c.h.b16 %v98
  %v562 = vunpack.c.l.b16 %v99
  %v563 = vunpack.c.h.b16 %v99
  %v564 = vunpack.c.l.b16 %v100
  %v565 = vunpack.c.h.b16 %v100
  %v566 = vunpack.c.l.b16 %v101
  %v567 = vunpack.c.h.b16 %v101
  %v568 = vunpack.c.l.b16 %v102
  %v569 = vunpack.c.h.b16 %v102
  %v570 = vunpack.c.l.b16 %v103
  %v571 = vunpack.c.h.b16 %v103
  %v572 = vunpack.c.l.b16 %v104
  %v573 = vunpack.c.h.b16 %v104
  %v574 = vunpack.c.l.b16 %v105
  %v575 = vunpack.c.h.b16 %v105
  %v576 = vunpack.c.l.b16 %v106
  %v577 = vunpack.c.h.b16 %v106
  %v578 = vunpack.c.l.b16 %v107
  %v579 = vunpack.c.h.b16 %v107
  %v580 = vunpack.c.l.b16 %v108
  %v581 = vunpack.c.h.b16 %v108
  %v582 = vunpack.c.l.b16 %v109
  %v583 = vunpack.c.h.b16 %v109
  %v584 = vunpack.c.l.b16 %v110
  %v585 = vunpack.c.h.b16 %v110
  %v586 = vunpack.c.l.b16 %v111
  %v587 = vunpack.c.h.b16 %v111
  %v588 = vunpack.c.l.b16 %v112
  %v589 = vunpack.c.h.b16 %v112
  %v590 = vunpack.c.l.b16 %v113
  %v591 = vunpack.c.h.b16 %v113
  %v592 = vunpack.c.l.b16 %v114
  %v593 = vunpack.c.h.b16 %v114
  %v594 = vunpack.c.l.b16 %v115
  %v595 = vunpack.c.h.b16 %v115
  %v596 = vunpack.c.l.b16 %v116
  %v597 = vunpack.c.h.b16 %v116
  %v598 = vunpack.c.l.b16 %v117
  %v599 = vunpack.c.h.b16 %v117
  %v600 = vunpack.c.l.b16 %v118
  %v601 = vunpack.c.h.b16 %v118
  %v602 = vunpack.c.l.b16 %v119
  %v603 = vunpack.c.h.b16 %v119
  %v604 = vunpack.c.l.b16 %v120
  %v605 = vunpack.c.h.b16 %v120
  %v606 = vunpack.c.l.b16 %v121
  %v607 = vunpack.c.h.b16 %v121
  %v608 = vunpack.c.l.b16 %v122
  %v609 = vunpack.c.h.b16 %v122
  %v610 = vunpack.c.l.b16 %v123
  %v611 = vunpack.c.h.b16 %v123
  %v612 = vunpack.c.l.b16 %v124
  %v613 = vunpack.c.h.b16 %v124
  %v614 = vunpack.c.l.b16 %v125
  %v615 = vunpack.c.h.b16 %v125
  %v616 = vunpack.c.l.b16 %v126
  %v617 = vunpack.c.h.b16 %v126
  %v618 = vunpack.c.l.b16 %v127
  %v619 = vunpack.c.h.b16 %v127
  %v620 = vunpack.c.l.b16 %v128
  %v621 = vunpack.c.h.b16 %v128
  %v622 = vunpack.c.l.b16 %v129
  %v623 = vunpack.c.h.b16 %v129
  %v624 = vunpack.c.l.b16 %v130
  %v625 = vunpack.c.h.b16 %v130
  %v626 = vunpack.c.l.b16 %v131
  %v627 = vunpack.c.h.b16 %v131
  %v628 = vunpack.c.l.b16 %v132
  %v629 = vunpack.c.h.b16 %v132
  %v630 = vunpack.c.l.b16 %v133
  %v631 = vunpack.c.h.b16 %v133
  %v632 = vunpack.c.l.b16 %v134
  %v633 = vunpack.c.h.b16 %v134
  %v634 = vunpack.c.l.b16 %v135
  %v635 = vunpack.c.h.b16 %v135
  %v636 = vunpack.c.l.b16 %v136
  %v637 = vunpack.c.h.b16 %v136
  %v638 = vunpack.c.l.b16 %v137
  %v639 = vunpack.c.h.b16 %v137
  %v640 = vunpack.c.l.b16 %v138
  %v641 = vunpack.c.h.b16 %v138
  %v642 = vunpack.c.l.b16 %v139
  %v643 = vunpack.c.h.b16 %v139
  %v644 = vunpack.c.l.b16 %v140
  %v645 = vunpack.c.h.b16 %v140
  %v646 = vunpack.c.l.b16 %v141
  %v647 = vunpack.c.h.b16 %v141
  %v648 = vunpack.c.l.b16 %v142
  %v649 = vunpack.c.h.b16 %v142
  %v650 = vunpack.c.l.b16 %v143
  %v651 = vunpack.c.h.b16 %v143
  %v652 = vunpack.c.l.b16 %v144
  %v653 = vunpack.c.h.b16 %v144
  %v654 = vunpack.c.l.b16 %v145
  %v655 = vunpack.c.h.b16 %v145
  %v656 = vunpack.c.l.b16 %v146
  %v657 = vunpack.c.h.b16 %v146
  %v658 = vunpack.c.l.b16 %v147
  %v659 = vunpack.c.h.b16 %v147
  %v660 = vunpack.c.l.b16 %v148
  %v661 = vunpack.c.h.b16 %v148
  %v662 = vunpack.c.l.b16 %v149
  %v663 = vunpack.c.h.b16 %v149
  %v664 = vunpack.c.l.b16 %v150
  %v665 = vunpack.c.h.b16 %v150
  %v666 = vunpack.c.l.b16 %v151
  %v667 = vunpack.c.h.b16 %v151
  %v668 = vunpack.c.l.b16 %v152
  %v669 = vunpack.c.h.b16 %v152
  %v670 = vunpack.c.l.b16 %v153
  %v671 = vunpack.c.h.b16 %v153
  %v672 = vunpack.c.l.b16 %v154
  %v673 = vunpack.c.h.b16 %v154
  %v674 = vunpack.c.l.b16 %v155
  %v675 = vunpack.c.h.b16 %v155
  %v676 = vunpack.c.l.b16 %v156
  %v677 = vunpack.c.h.b16 %v156
  %v678 = vunpack.c.l.b16 %v157
  %v679 = vunpack.c.h.b16 %v157
  %v680 = vunpack.c.l.b16 %v158
  %v681 = vunpack.c.h.b16 %v158
  %v682 = vunpack.c.l.b16 %v159
  %v683 = vunpack.c.h.b16 %v159
  %v684 = vunpack.c.l.b16 %v160
  %v685 = vunpack.c.h.b16 %v160
  %v686 = vunpack.c.l.b16 %v161
  %v687 = vunpack.c.h.b16 %v161
  %v688 = vunpack.c.l.b16 %v162
  %v689 = vunpack.c.h.b16 %v162
  %v690 = vunpack.c.l.b16 %v163
  %v691 = vunpack.c.h.b16 %v163
  %v692 = vunpack.c.l.b16 %v164
  %v693 = vunpack.c.h.b16 %v164
  %v694 = vunpack.c.l.b16 %v165
  %v695 = vunpack.c.h.b16 %v165
  %v696 = vunpack.c.l.b16 %v166
  %v697 = vunpack.c.h.b16 %v166
  %v698 = vunpack.c.l.b16 %v167
  %v699 = vunpack.c.h.b16 %v167
  %v700 = vunpack.c.l.b16 %v168
  %v701 = vunpack.c.h.b16 %v168
  %v702 = vunpack.c.l.b16 %v169
  %v703 = vunpack.c.h.b16 %v169
  %v704 = vunpack.c.l.b16 %v170
  %v705 = vunpack.c.h.b16 %v170
  %v706 = vunpack.c.l.b16 %v171
  %v707 = vunpack.c.h.b16 %v171
  %v708 = vunpack.c.l.b16 %v172
  %v709 = vunpack.c.h.b16 %v172
  %v710 = vunpack.c.l.b16 %v173
  %v711 = vunpack.c.h.b16 %v173
  %v712 = vunpack.c.l.b16 %v174
  %v713 = vunpack.c.h.b16 %v174
  %v714 = vunpack.c.l.b16 %v175
  %v715 = vunpack.c.h.b16 %v175
  %v716 = vunpack.c.l.b16 %v176
  %v717 = vunpack.c.h.b16 %v176
  %v718 = vunpack.c.l.b16 %v177
  %v719 = vunpack.c.h.b16 %v177
  %v720 = vunpack.c.l.b16 %v178
  %v721 = vunpack.c.h.b16 %v178
  %v722 = vunpack.c.l.b16 %v179
  %v723 = vunpack.c.h.b16 %v179
  %v724 = vunpack.c.l.b16 %v180
  %v725 = vunpack.c.h.b16 %v180
  %v726 = vunpack.c.l.b16 %v181
  %v727 = vunpack.c.h.b16 %v181
  %v728 = vunpack.c.l.b16 %v182
  %v729 = vunpack.c.h.b16 %v182
  %v730 = vunpack.c.l.b16 %v183
  %v731 = vunpack.c.h.b16 %v183
  %v732 = vunpack.c.l.b16 %v184
  %v733 = vunpack.c.h.b16 %v184
  %v734 = vunpack.c.l.b16 %v185
  %v735 = vunpack.c.h.b16 %v185
  %v736 = vunpack.c.l.b16 %v186
  %v737 = vunpack.c.h.b16 %v186
  %v738 = vunpack.c.l.b16 %v187
  %v739 = vunpack.c.h.b16 %v187
  %v740 = vunpack.c.l.b16 %v188
  %v741 = vunpack.c.h.b16 %v188
  %v742 = vunpack.c.l.b16 %v189
  %v743 = vunpack.c.h.b16 %v189
  %v744 = vunpack.c.l.b16 %v190
  %v745 = vunpack.c.h.b16 %v190
  %v746 = vunpack.c.l.b16 %v191
  %v747 = vunpack.c.h.b16 %v191
  %v748 = vunpack.c.l.b16 %v192
  %v749 = vunpack.c.h.b16 %v192
  %v750 = vunpack.c.l.b16 %v193
  %v751 = vunpack.c.h.b16 %v193
  %v752 = vunpack.c.l.b16 %v194
  %v753 = vunpack.c.h.b16 %v194
  %v754 = vunpack.c.l.b16 %v195
  %v755 = vunpack.c.h.b16 %v195
  %v756 = vunpack.c.l.b16 %v196
  %v757 = vunpack.c.h.b16 %v196
  %v758 = vunpack.c.l.b16 %v197
  %v759 = vunpack.c.h.b16 %v197
  %v760 = vunpack.c.l.b16 %v198
  %v761 = vunpack.c.h.b16 %v198
  %v762 = vunpack.c.l.b16 %v199
  %v763 = vunpack.c.h.b16 %v199
  %v764 = vunpack.c.l.b16 %v200
  %v765 = vunpack.c.h.b16 %v200
  %v766 = vunpack.c.l.b16 %v201
  %v767 = vunpack.c.h.b16 %v201
  %v768 = vunpack.c.l.b16 %v202
  %v769 = vunpack.c.h.b16 %v202
  %v770 = vunpack.c.l.b16 %v203
  %v771 = vunpack.c.h.b16 %v203
  %v772 = vunpack.c.l.b16 %v204
  %v773 = vunpack.c.h.b16 %v204
  %v774 = vunpack.c.l.b16 %v205
  %v775 = vunpack.c.h.b16 %v205
  %v776 = vunpack.c.l.b16 %v206
  %v777 = vunpack.c.h.b16 %v206
  %v778 = vunpack.c.l.b16 %v207
  %v779 = vunpack.c.h.b16 %v207
  %v780 = vunpack.c.l.b16 %v208
  %v781 = vunpack.c.h.b16 %v208
  %v782 = vunpack.c.l.b16 %v209
  %v783 = vunpack.c.h.b16 %v209
  %v784 = vunpack.c.l.b16 %v210
  %v785 = vunpack.c.h.b16 %v210
  %v786 = vunpack.c.l.b16 %v211
  %v787 = vunpack.c.h.b16 %v211
  %v788 = vunpack.c.l.b16 %v212
  %v789 = vunpack.c.h.b16 %v212
  %v790 = vunpack.c.l.b16 %v213
  %v791 = vunpack.c.h.b16 %v213
  %v792 = vunpack.c.l.b16 %v214
  %v793 = vunpack.c.h.b16 %v214
  %v794 = vunpack.c.l.b16 %v215
  %v795 = vunpack.c.h.b16 %v215
  %v796 = vunpack.c.l.b16 %v216
  %v797 = vunpack.c.h.b16 %v216
  %v798 = vunpack.c.l.b16 %v217
  %v799 = vunpack.c.h.b16 %v217
  %v800 = vunpack.c.l.b16 %v218
  %v801 = vunpack.c.h.b16 %v218
  %v802 = vunpack.c.l.b16 %v219
  %v803 = vunpack.c.h.b16 %v219
  %v804 = vunpack.c.l.b16 %v220
  %v805 = vunpack.c.h.b16 %v220
  %v806 = vunpack.c.l.b16 %v221
  %v807 = vunpack.c.h.b16 %v221
  %v808 = vunpack.c.l.b16 %v222
  %v809 = vunpack.c.h.b16 %v222
  %v810 = vunpack.c.l.b16 %v223
  %v811 = vunpack.c.h.b16 %v223
  %v812 = vunpack.c.l.b16 %v224
  %v813 = vunpack.c.h.b16 %v224
  %v814 = vunpack.c.l.b16 %v225
  %v815 = vunpack.c.h.b16 %v225
  %v816 = vunpack.c.l.b16 %v226
  %v817 = vunpack.c.h.b16 %v226
  %v818 = vunpack.c.l.b16 %v227
  %v819 = vunpack.c.h.b16 %v227
  %v820 = vunpack.c.l.b16 %v228
  %v821 = vunpack.c.h.b16 %v228
  %v822 = vunpack.c.l.b16 %v229
  %v823 = vunpack.c.h.b16 %v229
  %v824 = vunpack.c.l.b16 %v230
  %v825 = vunpack.c.h.b16 %v230
  %v826 = vunpack.c.l.b16 %v231
  %v827 = vunpack.c.h.b16 %v231
  %v828 = vunpack.c.l.b16 %v232
  %v829 = vunpack.c.h.b16 %v232
  %v830 = vpack.c.b16 %v450, %v446
  %v831 = vpack.c.b16 %v451, %v447
  %v832 = vpack.c.b16 %v452, %v448
  %v833 = vpack.c.b16 %v453, %v449
  %v834 = vpack.c.b16 %v458, %v454
  %v835 = vpack.c.b16 %v459, %v455
  %v836 = vpack.c.b16 %v460, %v456
  %v837 = vpack.c.b16 %v461, %v457
  %v838 = vpack.c.b16 %v466, %v462
  %v839 = vpack.c.b16 %v467, %v463
  %v840 = vpack.c.b16 %v468, %v464
  %v841 = vpack.c.b16 %v469, %v465
  %v842 = vpack.c.b16 %v474, %v470
  %v843 = vpack.c.b16 %v475, %v471
  %v844 = vpack.c.b16 %v476, %v472
  %v845 = vpack.c.b16 %v477, %v473
  %v846 = vpack.c.b16 %v482, %v478
  %v847 = vpack.c.b16 %v483, %v479
  %v848 = vpack.c.b16 %v484, %v480
  %v849 = vpack.c.b16 %v485, %v481
  %v850 = vpack.c.b16 %v490, %v486
  %v851 = vpack.c.b16 %v491, %v487
  %v852 = vpack.c.b16 %v492, %v488
  %v853 = vpack.c.b16 %v493, %v489
  %v854 = vpack.c.b16 %v498, %v494
  %v855 = vpack.c.b16 %v499, %v495
  %v856 = vpack.c.b16 %v500, %v496
  %v857 = vpack.c.b16 %v501, %v497
  %v858 = vpack.c.b16 %v506, %v502
  %v859 = vpack.c.b16 %v507, %v503
  %v860 = vpack.c.b16 %v508, %v504
  %v861 = vpack.c.b16 %v509, %v505
  %v862 = vpack.c.b16 %v514, %v510
  %v863 = vpack.c.b16 %v515, %v511
  %v864 = vpack.c.b16 %v516, %v512
  %v865 = vpack.c.b16 %v517, %v513
  %v866 = vpack.c.b16 %v522, %v518
  %v867 = vpack.c.b16 %v523, %v519
  %v868 = vpack.c.b16 %v524, %v520
  %v869 = vpack.c.b16 %v525, %v521
  %v870 = vpack.c.b16 %v530, %v526
  %v871 = vpack.c.b16 %v531, %v527
  %v872 = vpack.c.b16 %v532, %v528
  %v873 = vpack.c.b16 %v533, %v529
  %v874 = vpack.c.b16 %v538, %v534
  %v875 = vpack.c.b16 %v539, %v535
  %v876 = vpack.c.b16 %v540, %v536
  %v877 = vpack.c.b16 %v541, %v537
  %v878 = vpack.c.b16 %v546, %v542
  %v879 = vpack.c.b16 %v547, %v543
  %v880 = vpack.c.b16 %v548, %v544
  %v881 = vpack.c.b16 %v549, %v545
  %v882 = vpack.c.b16 %v554, %v550
  %v883 = vpack.c.b16 %v555, %v551
  %v884 = vpack.c.b16 %v556, %v552
  %v885 = vpack.c.b16 %v557, %v553
  %v886 = vpack.c.b16 %v562, %v558
  %v887 = vpack.c.b16 %v563, %v559
  %v888 = vpack.c.b16 %v564, %v560
  %v889 = vpack.c.b16 %v565, %v561
  %v890 = vpack.c.b16 %v570, %v566
  %v891 = vpack.c.b16 %v571, %v567
  %v892 = vpack.c.b16 %v572, %v568
  %v893 = vpack.c.b16 %v573, %v569
  %v894 = vpack.c.b16 %v578, %v574
  %v895 = vpack.c.b16 %v579, %v575
  %v896 = vpack.c.b16 %v580, %v576
  %v897 = vpack.c.b16 %v581, %v577
  %v898 = vpack.c.b16 %v586, %v582
  %v899 = vpack.c.b16 %v587, %v583
  %v900 = vpack.c.b16 %v588, %v584
  %v901 = vpack.c.b16 %v589, %v585
  %v902 = vpack.c.b16 %v594, %v590
  %v903 = vpack.c.b16 %v595, %v591
  %v904 = vpack.c.b16 %v596, %v592
  %v905 = vpack.c.b16 %v597, %v593
  %v906 = vpack.c.b16 %v602, %v598
  %v907 = vpack.c.b16 %v603, %v599
  %v908 = vpack.c.b16 %v604, %v600
  %v909 = vpack.c.b16 %v605, %v601
  %v910 = vpack.c.b16 %v610, %v606
  %v911 = vpack.c.b16 %v611, %v607
  %v912 = vpack.c.b16 %v612, %v608
  %v913 = vpack.c.b16 %v613, %v609
  %v914 = vpack.c.b16 %v618, %v614
  %v915 = vpack.c.b16 %v619, %v615
  %v916 = vpack.c.b16 %v620, %v616
  %v917 = vpack.c.b16 %v621, %v617
  %v918 = vpack.c.b16 %v626, %v622
  %v919 = vpack.c.b16 %v627, %v623
  %v920 = vpack.c.b16 %v628, %v624
  %v921 = vpack.c.b16 %v629, %v625
  %v922 = vpack.c.b16 %v634, %v630
  %v923 = vpack.c.b16 %v635, %v631
  %v924 = vpack.c.b16 %v636, %v632
  %v925 = vpack.c.b16 %v637, %v633
  %v926 = vpack.c.b16 %v642, %v638
  %v927 = vpack.c.b16 %v643, %v639
  %v928 = vpack.c.b16 %v644, %v640
  %v929 = vpack.c.b16 %v645, %v641
  %v930 = vpack.c.b16 %v650, %v646
  %v931 = vpack.c.b16 %v651, %v647
  %v932 = vpack.c.b16 %v652, %v648
  %v933 = vpack.c.b16 %v653, %v649
  %v934 = vpack.c.b16 %v658, %v654
  %v935 = vpack.c.b16 %v659, %v655
  %v936 = vpack.c.b16 %v660, %v656
  %v937 = vpack.c.b16 %v661, %v657
  %v938 = vpack.c.b16 %v666, %v662
  %v939 = vpack.c.b16 %v667, %v663
  %v940 = vpack.c.b16 %v668, %v664
  %v941 = vpack.c.b16 %v669, %v665
  %v942 = vpack.c.b16 %v674, %v670
  %v943 = vpack.c.b16 %v675, %v671
  %v944 = vpack.c.b16 %v676, %v672
  %v945 = vpack.c.b16 %v677, %v673
  %v946 = vpack.c.b16 %v682, %v678
  %v947 = vpack.c.b16 %v683, %v679
  %v948 = vpack.c.b16 %v684, %v680
  %v949 = vpack.c.b16 %v685, %v681
  %v950 = vpack.c.b16 %v690, %v686
  %v951 = vpack.c.b16 %v691, %v687
  %v952 = vpack.c.b16 %v692, %v688
  %v953 = vpack.c.b16 %v693, %v689
  %v954 = vpack.c.b16 %v698, %v694
  %v955 = vpack.c.b16 %v699, %v695
  %v956 = vpack.c.b16 %v700, %v696
  %v957 = vpack.c.b16 %v701, %v697
  %v958 = vpack.c.b16 %v706, %v702
  %v959 = vpack.c.b16 %v707, %v703
  %v960 = vpack.c.b16 %v708, %v704
  %v961 = vpack.c.b16 %v709, %v705
  %v962 = vpack.c.b16 %v714, %v710
  %v963 = vpack.c.b16 %v715, %v711
  %v964 = vpack.c.b16 %v716, %v712
  %v965 = vpack.c.b16 %v717, %v713
  %v966 = vpack.c.b16 %v722, %v718
  %v967 = vpack.c.b16 %v723, %v719
  %v968 = vpack.c.b16 %v724, %v720
  %v969 = vpack.c.b16 %v725, %v721
  %v970 = vpack.c.b16 %v730, %v726
  %v971 = vpack.c.b16 %v731, %v727
  %v972 = vpack.c.b16 %v732, %v728
  %v973 = vpack.c.b16 %v733, %v729
  %v974 = vpack.c.b16 %v738, %v734
  %v975 = vpack.c.b16 %v739, %v735
  %v976 = vpack.c.b16 %v740, %v736
  %v977 = vpack.c.b16 %v741, %v737
  %v978 = vpack.c.b16 %v746, %v742
  %v979 = vpack.c.b16 %v747, %v743
  %v980 = vpack.c.b16 %v748, %v744
  %v981 = vpack.c.b16 %v749, %v745
  %v982 = vpack.c.b16 %v754, %v750
  %v983 = vpack.c.b16 %v755, %v751
  %v984 = vpack.c.b16 %v756, %v752
  %v985 = vpack.c.b16 %v757, %v753
  %v986 = vpack.c.b16 %v762, %v758
  %v987 = vpack.c.b16 %v763, %v759
  %v988 = vpack.c.b16 %v764, %v760
  %v989 = vpack.c.b16 %v765, %v761
  %v990 = vpack.c.b16 %v770, %v766
  %v991 = vpack.c.b16 %v771, %v767
  %v992 = vpack.c.b16 %v772, %v768
  %v993 = vpack.c.b16 %v773, %v769
  %v994 = vpack.c.b16 %v778, %v774
  %v995 = vpack.c.b16 %v779, %v775
  %v996 = vpack.c.b16 %v780, %v776
  %v997 = vpack.c.b16 %v781, %v777
  %v998 = vpack.c.b16 %v786, %v782
  %v999 = vpack.c.b16 %v787, %v783
  %v1000 = vpack.c.b16 %v788, %v784
  %v1001 = vpack.c.b16 %v789, %v785
  %v1002 = vpack.c.b16 %v794, %v790
  %v1003 = vpack.c.b16 %v795, %v791
  %v1004 = vpack.c.b16 %v796, %v792
  %v1005 = vpack.c.b16 %v797, %v793
  %v1006 = vpack.c.b16 %v802, %v798
  %v1007 = vpack.c.b16 %v803, %v799
  %v1008 = vpack.c.b16 %v804, %v800
  %v1009 = vpack.c.b16 %v805, %v801
  %v1010 = vpack.c.b16 %v810, %v806
  %v1011 = vpack.c.b16 %v811, %v807
  %v1012 = vpack.c.b16 %v812, %v808
  %v1013 = vpack.c.b16 %v813, %v809
  %v1014 = vpack.c.b16 %v818, %v814
  %v1015 = vpack.c.b16 %v819, %v815
  %v1016 = vpack.c.b16 %v820, %v816
  %v1017 = vpack.c.b16 %v821, %v817
  %v1018 = vpack.c.b16 %v826, %v822
  %v1019 = vpack.c.b16 %v827, %v823
  %v1020 = vpack.c.b16 %v828, %v824
  %v1021 = vpack.c.b16 %v829, %v825
  %1214 = vmatprep.subr.bf16.mxu0 %v859
  %1215 = vmatpush1.bf16.msra.mxu0 %v858
  %1216 = vmatprep.subr.bf16.mxu0 %v855
  %1217 = vmatpush1.bf16.msra.mxu0 %v854
  %1218 = vmatprep.subr.bf16.mxu0 %v851
  %1219 = vmatpush1.bf16.msra.mxu0 %v850
  %1220 = vmatprep.subr.bf16.mxu0 %v847
  %1221 = vmatpush1.bf16.msra.mxu0 %v846
  %1222 = vmatprep.subr.bf16.mxu0 %v843
  %1223 = vmatpush1.bf16.msra.mxu0 %v842
  %1224 = vmatprep.subr.bf16.mxu0 %v839
  %1225 = vmatpush1.bf16.msra.mxu0 %v838
  %1226 = vmatprep.subr.bf16.mxu0 %v835
  %1227 = vmatpush1.bf16.msra.mxu0 %v834
  %1228 = vmatprep.subr.bf16.mxu0 %v831
  %1229 = vmatpush1.bf16.msra.mxu0 %v830
  %1230 = vmatprep.subr.bf16.mxu0 %v891
  %1231 = vmatpush2.bf16.msra.mxu0 %v890
  %1232 = vmatprep.subr.bf16.mxu0 %v887
  %1233 = vmatpush2.bf16.msra.mxu0 %v886
  %1234 = vmatprep.subr.bf16.mxu0 %v883
  %1235 = vmatpush2.bf16.msra.mxu0 %v882
  %1236 = vmatprep.subr.bf16.mxu0 %v879
  %1237 = vmatpush2.bf16.msra.mxu0 %v878
  %1238 = vmatprep.subr.bf16.mxu0 %v875
  %1239 = vmatpush2.bf16.msra.mxu0 %v874
  %1240 = vmatprep.subr.bf16.mxu0 %v871
  %1241 = vmatpush2.bf16.msra.mxu0 %v870
  %1242 = vmatprep.subr.bf16.mxu0 %v867
  %1243 = vmatpush2.bf16.msra.mxu0 %v866
  %1244 = vmatprep.subr.bf16.mxu0 %v863
  %1245 = vmatpush2.bf16.msra.mxu0 %v862
  %1246 = vmatprep.mubr.bf16.mxu0 %v243
  %1247 = vmatmul.mubr.bf16.gmra.mxu0 %v242
  %v1248 = vpop.f32.mrf.mxu0
  %v1249 = vadd.f32 0.0, %v1248
  %v1250 = vpop.f32.mrf.mxu0
  %v1251 = vadd.f32 0.0, %v1250
  %v1252 = vpop.f32.mrf.mxu0
  %v1253 = vpop.f32.mrf.mxu0
  %1254 = vdwg.mxu0
  %1255 = vmatprep.subr.bf16.mxu0 %v923
  %1256 = vmatpush1.bf16.msra.mxu0 %v922
  %1257 = vmatprep.subr.bf16.mxu0 %v919
  %1258 = vmatpush1.bf16.msra.mxu0 %v918
  %1259 = vmatprep.subr.bf16.mxu0 %v915
  %1260 = vmatpush1.bf16.msra.mxu0 %v914
  %1261 = vmatprep.subr.bf16.mxu0 %v911
  %1262 = vmatpush1.bf16.msra.mxu0 %v910
  %1263 = vmatprep.subr.bf16.mxu0 %v907
  %1264 = vmatpush1.bf16.msra.mxu0 %v906
  %1265 = vmatprep.subr.bf16.mxu0 %v903
  %1266 = vmatpush1.bf16.msra.mxu0 %v902
  %1267 = vmatprep.subr.bf16.mxu0 %v899
  %1268 = vmatpush1.bf16.msra.mxu0 %v898
  %1269 = vmatprep.subr.bf16.mxu0 %v895
  %1270 = vmatpush1.bf16.msra.mxu0 %v894
  %1271 = vmatprep.subr.bf16.mxu0 %v955
  %1272 = vmatpush2.bf16.msra.mxu0 %v954
  %1273 = vmatprep.subr.bf16.mxu0 %v951
  %1274 = vmatpush2.bf16.msra.mxu0 %v950
  %1275 = vmatprep.subr.bf16.mxu0 %v947
  %1276 = vmatpush2.bf16.msra.mxu0 %v946
  %1277 = vmatprep.subr.bf16.mxu0 %v943
  %1278 = vmatpush2.bf16.msra.mxu0 %v942
  %1279 = vmatprep.subr.bf16.mxu0 %v939
  %1280 = vmatpush2.bf16.msra.mxu0 %v938
  %1281 = vmatprep.subr.bf16.mxu0 %v935
  %1282 = vmatpush2.bf16.msra.mxu0 %v934
  %1283 = vmatprep.subr.bf16.mxu0 %v931
  %1284 = vmatpush2.bf16.msra.mxu0 %v930
  %1285 = vmatprep.subr.bf16.mxu0 %v927
  %1286 = vmatpush2.bf16.msra.mxu0 %v926
  %1287 = vmatprep.mubr.bf16.mxu0 %v245
  %1288 = vmatmul.mubr.bf16.gmra.mxu0 %v244
  %v1289 = vpop.f32.mrf.mxu0
  %v1290 = vadd.f32 %v1249, %v1289
  %v1291 = vpop.f32.mrf.mxu0
  %v1292 = vadd.f32 %v1251, %v1291
  %v1293 = vpop.f32.mrf.mxu0
  %v1294 = vpop.f32.mrf.mxu0
  %1295 = vdwg.mxu0
  %1296 = vmatprep.subr.bf16.mxu0 %v987
  %1297 = vmatpush1.bf16.msra.mxu0 %v986
  %1298 = vmatprep.subr.bf16.mxu0 %v983
  %1299 = vmatpush1.bf16.msra.mxu0 %v982
  %1300 = vmatprep.subr.bf16.mxu0 %v979
  %1301 = vmatpush1.bf16.msra.mxu0 %v978
  %1302 = vmatprep.subr.bf16.mxu0 %v975
  %1303 = vmatpush1.bf16.msra.mxu0 %v974
  %1304 = vmatprep.subr.bf16.mxu0 %v971
  %1305 = vmatpush1.bf16.msra.mxu0 %v970
  %1306 = vmatprep.subr.bf16.mxu0 %v967
  %1307 = vmatpush1.bf16.msra.mxu0 %v966
  %1308 = vmatprep.subr.bf16.mxu0 %v963
  %1309 = vmatpush1.bf16.msra.mxu0 %v962
  %1310 = vmatprep.subr.bf16.mxu0 %v959
  %1311 = vmatpush1.bf16.msra.mxu0 %v958
  %1312 = vmatprep.subr.bf16.mxu0 %v1019
  %1313 = vmatpush2.bf16.msra.mxu0 %v1018
  %1314 = vmatprep.subr.bf16.mxu0 %v1015
  %1315 = vmatpush2.bf16.msra.mxu0 %v1014
  %1316 = vmatprep.subr.bf16.mxu0 %v1011
  %1317 = vmatpush2.bf16.msra.mxu0 %v1010
  %1318 = vmatprep.subr.bf16.mxu0 %v1007
  %1319 = vmatpush2.bf16.msra.mxu0 %v1006
  %1320 = vmatprep.subr.bf16.mxu0 %v1003
  %1321 = vmatpush2.bf16.msra.mxu0 %v1002
  %1322 = vmatprep.subr.bf16.mxu0 %v999
  %1323 = vmatpush2.bf16.msra.mxu0 %v998
  %1324 = vmatprep.subr.bf16.mxu0 %v995
  %1325 = vmatpush2.bf16.msra.mxu0 %v994
  %1326 = vmatprep.subr.bf16.mxu0 %v991
  %1327 = vmatpush2.bf16.msra.mxu0 %v990
  %1328 = vmatprep.mubr.bf16.mxu0 %v247
  %1329 = vmatmul.mubr.bf16.gmra.mxu0 %v246
  %v1330 = vpop.f32.mrf.mxu0
  %v1331 = vadd.f32 %v1290, %v1330
  %v1332 = vpop.f32.mrf.mxu0
  %v1333 = vadd.f32 %v1292, %v1332
  %v1334 = vpop.f32.mrf.mxu0
  %v1335 = vpop.f32.mrf.mxu0
  %1336 = vdwg.mxu0
  %1337 = vmatprep.subr.bf16.mxu0 %v861
  %1338 = vmatpush1.bf16.msra.mxu0 %v860
  %1339 = vmatprep.subr.bf16.mxu0 %v857
  %1340 = vmatpush1.bf16.msra.mxu0 %v856
  %1341 = vmatprep.subr.bf16.mxu0 %v853
  %1342 = vmatpush1.bf16.msra.mxu0 %v852
  %1343 = vmatprep.subr.bf16.mxu0 %v849
  %1344 = vmatpush1.bf16.msra.mxu0 %v848
  %1345 = vmatprep.subr.bf16.mxu0 %v845
  %1346 = vmatpush1.bf16.msra.mxu0 %v844
  %1347 = vmatprep.subr.bf16.mxu0 %v841
  %1348 = vmatpush1.bf16.msra.mxu0 %v840
  %1349 = vmatprep.subr.bf16.mxu0 %v837
  %1350 = vmatpush1.bf16.msra.mxu0 %v836
  %1351 = vmatprep.subr.bf16.mxu0 %v833
  %1352 = vmatpush1.bf16.msra.mxu0 %v832
  %1353 = vmatprep.subr.bf16.mxu0 %v893
  %1354 = vmatpush2.bf16.msra.mxu0 %v892
  %1355 = vmatprep.subr.bf16.mxu0 %v889
  %1356 = vmatpush2.bf16.msra.mxu0 %v888
  %1357 = vmatprep.subr.bf16.mxu0 %v885
  %1358 = vmatpush2.bf16.msra.mxu0 %v884
  %1359 = vmatprep.subr.bf16.mxu0 %v881
  %1360 = vmatpush2.bf16.msra.mxu0 %v880
  %1361 = vmatprep.subr.bf16.mxu0 %v877
  %1362 = vmatpush2.bf16.msra.mxu0 %v876
  %1363 = vmatprep.subr.bf16.mxu0 %v873
  %1364 = vmatpush2.bf16.msra.mxu0 %v872
  %1365 = vmatprep.subr.bf16.mxu0 %v869
  %1366 = vmatpush2.bf16.msra.mxu0 %v868
  %1367 = vmatprep.subr.bf16.mxu0 %v865
  %1368 = vmatpush2.bf16.msra.mxu0 %v864
  %1369 = vmatprep.mubr.bf16.mxu0 %v243
  %1370 = vmatmul.mubr.bf16.gmra.mxu0 %v242
  %v1371 = vpop.f32.mrf.mxu0
  %v1372 = vadd.f32 0.0, %v1371
  %v1373 = vpop.f32.mrf.mxu0
  %v1374 = vadd.f32 0.0, %v1373
  %v1375 = vpop.f32.mrf.mxu0
  %v1376 = vpop.f32.mrf.mxu0
  %1377 = vdwg.mxu0
  %1378 = vmatprep.subr.bf16.mxu0 %v925
  %1379 = vmatpush1.bf16.msra.mxu0 %v924
  %1380 = vmatprep.subr.bf16.mxu0 %v921
  %1381 = vmatpush1.bf16.msra.mxu0 %v920
  %1382 = vmatprep.subr.bf16.mxu0 %v917
  %1383 = vmatpush1.bf16.msra.mxu0 %v916
  %1384 = vmatprep.subr.bf16.mxu0 %v913
  %1385 = vmatpush1.bf16.msra.mxu0 %v912
  %1386 = vmatprep.subr.bf16.mxu0 %v909
  %1387 = vmatpush1.bf16.msra.mxu0 %v908
  %1388 = vmatprep.subr.bf16.mxu0 %v905
  %1389 = vmatpush1.bf16.msra.mxu0 %v904
  %1390 = vmatprep.subr.bf16.mxu0 %v901
  %1391 = vmatpush1.bf16.msra.mxu0 %v900
  %1392 = vmatprep.subr.bf16.mxu0 %v897
  %1393 = vmatpush1.bf16.msra.mxu0 %v896
  %1394 = vmatprep.subr.bf16.mxu0 %v957
  %1395 = vmatpush2.bf16.msra.mxu0 %v956
  %1396 = vmatprep.subr.bf16.mxu0 %v953
  %1397 = vmatpush2.bf16.msra.mxu0 %v952
  %1398 = vmatprep.subr.bf16.mxu0 %v949
  %1399 = vmatpush2.bf16.msra.mxu0 %v948
  %1400 = vmatprep.subr.bf16.mxu0 %v945
  %1401 = vmatpush2.bf16.msra.mxu0 %v944
  %1402 = vmatprep.subr.bf16.mxu0 %v941
  %1403 = vmatpush2.bf16.msra.mxu0 %v940
  %1404 = vmatprep.subr.bf16.mxu0 %v937
  %1405 = vmatpush2.bf16.msra.mxu0 %v936
  %1406 = vmatprep.subr.bf16.mxu0 %v933
  %1407 = vmatpush2.bf16.msra.mxu0 %v932
  %1408 = vmatprep.subr.bf16.mxu0 %v929
  %1409 = vmatpush2.bf16.msra.mxu0 %v928
  %1410 = vmatprep.mubr.bf16.mxu0 %v245
  %1411 = vmatmul.mubr.bf16.gmra.mxu0 %v244
  %v1412 = vpop.f32.mrf.mxu0
  %v1413 = vadd.f32 %v1372, %v1412
  %v1414 = vpop.f32.mrf.mxu0
  %v1415 = vadd.f32 %v1374, %v1414
  %v1416 = vpop.f32.mrf.mxu0
  %v1417 = vpop.f32.mrf.mxu0
  %1418 = vdwg.mxu0
  %1419 = vmatprep.subr.bf16.mxu0 %v989
  %1420 = vmatpush1.bf16.msra.mxu0 %v988
  %1421 = vmatprep.subr.bf16.mxu0 %v985
  %1422 = vmatpush1.bf16.msra.mxu0 %v984
  %1423 = vmatprep.subr.bf16.mxu0 %v981
  %1424 = vmatpush1.bf16.msra.mxu0 %v980
  %1425 = vmatprep.subr.bf16.mxu0 %v977
  %1426 = vmatpush1.bf16.msra.mxu0 %v976
  %1427 = vmatprep.subr.bf16.mxu0 %v973
  %1428 = vmatpush1.bf16.msra.mxu0 %v972
  %1429 = vmatprep.subr.bf16.mxu0 %v969
  %1430 = vmatpush1.bf16.msra.mxu0 %v968
  %1431 = vmatprep.subr.bf16.mxu0 %v965
  %1432 = vmatpush1.bf16.msra.mxu0 %v964
  %1433 = vmatprep.subr.bf16.mxu0 %v961
  %1434 = vmatpush1.bf16.msra.mxu0 %v960
  %1435 = vmatprep.subr.bf16.mxu0 %v1021
  %1436 = vmatpush2.bf16.msra.mxu0 %v1020
  %1437 = vmatprep.subr.bf16.mxu0 %v1017
  %1438 = vmatpush2.bf16.msra.mxu0 %v1016
  %1439 = vmatprep.subr.bf16.mxu0 %v1013
  %1440 = vmatpush2.bf16.msra.mxu0 %v1012
  %1441 = vmatprep.subr.bf16.mxu0 %v1009
  %1442 = vmatpush2.bf16.msra.mxu0 %v1008
  %1443 = vmatprep.subr.bf16.mxu0 %v1005
  %1444 = vmatpush2.bf16.msra.mxu0 %v1004
  %1445 = vmatprep.subr.bf16.mxu0 %v1001
  %1446 = vmatpush2.bf16.msra.mxu0 %v1000
  %1447 = vmatprep.subr.bf16.mxu0 %v997
  %1448 = vmatpush2.bf16.msra.mxu0 %v996
  %1449 = vmatprep.subr.bf16.mxu0 %v993
  %1450 = vmatpush2.bf16.msra.mxu0 %v992
  %1451 = vmatprep.mubr.bf16.mxu0 %v247
  %1452 = vmatmul.mubr.bf16.gmra.mxu0 %v246
  %v1453 = vpop.f32.mrf.mxu0
  %v1454 = vadd.f32 %v1413, %v1453
  %v1455 = vpop.f32.mrf.mxu0
  %v1456 = vadd.f32 %v1415, %v1455
  %v1457 = vpop.f32.mrf.mxu0
  %v1458 = vpop.f32.mrf.mxu0
  %1459 = vdwg.mxu0
  %v1460 = vadd.f32 %v34, %v1331
  %v1461 = vadd.f32 %v35, %v1333
  %v1462 = vadd.f32 %v36, %v1454
  %v1463 = vadd.f32 %v37, %v1456
  %1464 = vst [vmem:[#allocation2] sm:$0xff] %v1460
  %1465 = vst [vmem:[#allocation2 + $0x8] sm:$0xff] %v1461
  %1466 = vst [vmem:[#allocation2 + $0x10] sm:$0xff] %v1462
  %1467 = vst [vmem:[#allocation2 + $0x18] sm:$0xff] %v1463
  // Predicated region
  $region34: #{discriminador_forward.1} parent=0 // pred_check
    %p1468 = pneg %p26
  $region35: #{discriminador_forward.1} parent=0 // pred_check_branch
    %1470 = sbr.rel (%p1468) target = $region37
  $region36: #{discriminador_forward.1} parent=0 // pred_region
    %v1471 = vld [vmem:[#allocation2] sm:$0xff]
    %v1472 = vld [vmem:[#allocation2 + $0x8] sm:$0xff]
    %v1473 = vld [vmem:[#allocation2 + $0x10] sm:$0xff]
    %v1474 = vld [vmem:[#allocation2 + $0x18] sm:$0xff]
    %v1475 = vld [vmem:[%s2] sm:$0xf]
    %v1477 = vlaneseq
    %v1478 = vshrl.u32 %v1477, 7
    %v1479 = vsub.s32 0, %v1478
    %v1480 = vrot.slane %v1475, %v1479
    %v1481 = vlaneseq
    %v1482 = vshrl.u32 %v1481, 7
    %v1483 = vsub.s32 1, %v1482
    %v1484 = vrot.slane %v1475, %v1483
    %v1485 = vlaneseq
    %v1486 = vshrl.u32 %v1485, 7
    %v1487 = vsub.s32 2, %v1486
    %v1488 = vrot.slane %v1475, %v1487
    %v1489 = vlaneseq
    %v1490 = vshrl.u32 %v1489, 7
    %v1491 = vsub.s32 3, %v1490
    %v1492 = vrot.slane %v1475, %v1491
    %v1497 = vadd.f32 %v1471, %v1480
    %v1498 = vadd.f32 %v1472, %v1484
    %v1499 = vadd.f32 %v1473, %v1488
    %v1500 = vadd.f32 %v1474, %v1492
    %vm1501 = vcmp.gt.f32.partialorder %v1497, 0.0
    %vm1502 = vcmp.gt.f32.partialorder %v1498, 0.0
    %vm1503 = vcmp.gt.f32.partialorder %v1499, 0.0
    %vm1504 = vcmp.gt.f32.partialorder %v1500, 0.0
    %v1505 = vmul.f32 %v1497, 0.2
    %v1506 = vmul.f32 %v1498, 0.2
    %v1507 = vmul.f32 %v1499, 0.2
    %v1508 = vmul.f32 %v1500, 0.2
    %v1509 = vsel %vm1501, %v1497, %v1505
    %v1510 = vsel %vm1502, %v1498, %v1506
    %v1511 = vsel %vm1503, %v1499, %v1507
    %v1512 = vsel %vm1504, %v1500, %v1508
    %v1513 = vld [vmem:[%s3] sm:$0xff]
    %v1514 = vld [vmem:[%s3 + $0x8] sm:$0xff]
    %v1515 = vld [vmem:[%s3 + $0x10] sm:$0xff]
    %v1516 = vld [vmem:[%s3 + $0x18] sm:$0xff]
    %v1517 = vld [vmem:[%s3 + $0x20] sm:$0xff]
    %v1518 = vld [vmem:[%s3 + $0x28] sm:$0xff]
    %v1519 = vld [vmem:[%s3 + $0x30] sm:$0xff]
    %v1520 = vld [vmem:[%s3 + $0x38] sm:$0xff]
    %v1521 = vld [vmem:[%s3 + $0x40] sm:$0xff]
    %v1522 = vld [vmem:[%s3 + $0x48] sm:$0xff]
    %v1523 = vld [vmem:[%s3 + $0x50] sm:$0xff]
    %v1524 = vld [vmem:[%s3 + $0x58] sm:$0xff]
    %v1525 = vld [vmem:[%s3 + $0x60] sm:$0xff]
    %v1526 = vld [vmem:[%s3 + $0x68] sm:$0xff]
    %v1527 = vld [vmem:[%s3 + $0x70] sm:$0xff]
    %v1528 = vld [vmem:[%s3 + $0x78] sm:$0xff]
    %v1529 = vld [vmem:[%s3 + $0x80] sm:$0xff]
    %v1530 = vld [vmem:[%s3 + $0x88] sm:$0xff]
    %v1531 = vld [vmem:[%s3 + $0x90] sm:$0xff]
    %v1532 = vld [vmem:[%s3 + $0x98] sm:$0xff]
    %v1533 = vld [vmem:[%s3 + $0xa0] sm:$0xff]
    %v1534 = vld [vmem:[%s3 + $0xa8] sm:$0xff]
    %v1535 = vld [vmem:[%s3 + $0xb0] sm:$0xff]
    %v1536 = vld [vmem:[%s3 + $0xb8] sm:$0xff]
    %v1537 = vld [vmem:[%s3 + $0xc0] sm:$0xff]
    %v1538 = vld [vmem:[%s3 + $0xc8] sm:$0xff]
    %v1539 = vld [vmem:[%s3 + $0xd0] sm:$0xff]
    %v1540 = vld [vmem:[%s3 + $0xd8] sm:$0xff]
    %v1541 = vld [vmem:[%s3 + $0xe0] sm:$0xff]
    %v1542 = vld [vmem:[%s3 + $0xe8] sm:$0xff]
    %v1543 = vld [vmem:[%s3 + $0xf0] sm:$0xff]
    %v1544 = vld [vmem:[%s3 + $0xf8] sm:$0xff]
    %v1545 = vld [vmem:[%s3 + $0x100] sm:$0xff]
    %v1546 = vld [vmem:[%s3 + $0x108] sm:$0xff]
    %v1547 = vld [vmem:[%s3 + $0x110] sm:$0xff]
    %v1548 = vld [vmem:[%s3 + $0x118] sm:$0xff]
    %v1549 = vld [vmem:[%s3 + $0x120] sm:$0xff]
    %v1550 = vld [vmem:[%s3 + $0x128] sm:$0xff]
    %v1551 = vld [vmem:[%s3 + $0x130] sm:$0xff]
    %v1552 = vld [vmem:[%s3 + $0x138] sm:$0xff]
    %v1553 = vld [vmem:[%s3 + $0x140] sm:$0xff]
    %v1554 = vld [vmem:[%s3 + $0x148] sm:$0xff]
    %v1555 = vld [vmem:[%s3 + $0x150] sm:$0xff]
    %v1556 = vld [vmem:[%s3 + $0x158] sm:$0xff]
    %v1557 = vld [vmem:[%s3 + $0x160] sm:$0xff]
    %v1558 = vld [vmem:[%s3 + $0x168] sm:$0xff]
    %v1559 = vld [vmem:[%s3 + $0x170] sm:$0xff]
    %v1560 = vld [vmem:[%s3 + $0x178] sm:$0xff]
    %v1561 = vld [vmem:[%s3 + $0x180] sm:$0xff]
    %v1562 = vld [vmem:[%s3 + $0x188] sm:$0xff]
    %v1563 = vld [vmem:[%s3 + $0x190] sm:$0xff]
    %v1564 = vld [vmem:[%s3 + $0x198] sm:$0xff]
    %v1565 = vld [vmem:[%s3 + $0x1a0] sm:$0xff]
    %v1566 = vld [vmem:[%s3 + $0x1a8] sm:$0xff]
    %v1567 = vld [vmem:[%s3 + $0x1b0] sm:$0xff]
    %v1568 = vld [vmem:[%s3 + $0x1b8] sm:$0xff]
    %v1569 = vld [vmem:[%s3 + $0x1c0] sm:$0xff]
    %v1570 = vld [vmem:[%s3 + $0x1c8] sm:$0xff]
    %v1571 = vld [vmem:[%s3 + $0x1d0] sm:$0xff]
    %v1572 = vld [vmem:[%s3 + $0x1d8] sm:$0xff]
    %v1573 = vld [vmem:[%s3 + $0x1e0] sm:$0xff]
    %v1574 = vld [vmem:[%s3 + $0x1e8] sm:$0xff]
    %v1575 = vld [vmem:[%s3 + $0x1f0] sm:$0xff]
    %v1576 = vld [vmem:[%s3 + $0x1f8] sm:$0xff]
    %v1577 = vld [vmem:[%s3 + $0x200] sm:$0xff]
    %v1578 = vld [vmem:[%s3 + $0x208] sm:$0xff]
    %v1579 = vld [vmem:[%s3 + $0x210] sm:$0xff]
    %v1580 = vld [vmem:[%s3 + $0x218] sm:$0xff]
    %v1581 = vld [vmem:[%s3 + $0x220] sm:$0xff]
    %v1582 = vld [vmem:[%s3 + $0x228] sm:$0xff]
    %v1583 = vld [vmem:[%s3 + $0x230] sm:$0xff]
    %v1584 = vld [vmem:[%s3 + $0x238] sm:$0xff]
    %v1585 = vld [vmem:[%s3 + $0x240] sm:$0xff]
    %v1586 = vld [vmem:[%s3 + $0x248] sm:$0xff]
    %v1587 = vld [vmem:[%s3 + $0x250] sm:$0xff]
    %v1588 = vld [vmem:[%s3 + $0x258] sm:$0xff]
    %v1589 = vld [vmem:[%s3 + $0x260] sm:$0xff]
    %v1590 = vld [vmem:[%s3 + $0x268] sm:$0xff]
    %v1591 = vld [vmem:[%s3 + $0x270] sm:$0xff]
    %v1592 = vld [vmem:[%s3 + $0x278] sm:$0xff]
    %v1593 = vld [vmem:[%s3 + $0x280] sm:$0xff]
    %v1594 = vld [vmem:[%s3 + $0x288] sm:$0xff]
    %v1595 = vld [vmem:[%s3 + $0x290] sm:$0xff]
    %v1596 = vld [vmem:[%s3 + $0x298] sm:$0xff]
    %v1597 = vld [vmem:[%s3 + $0x2a0] sm:$0xff]
    %v1598 = vld [vmem:[%s3 + $0x2a8] sm:$0xff]
    %v1599 = vld [vmem:[%s3 + $0x2b0] sm:$0xff]
    %v1600 = vld [vmem:[%s3 + $0x2b8] sm:$0xff]
    %v1601 = vld [vmem:[%s3 + $0x2c0] sm:$0xff]
    %v1602 = vld [vmem:[%s3 + $0x2c8] sm:$0xff]
    %v1603 = vld [vmem:[%s3 + $0x2d0] sm:$0xff]
    %v1604 = vld [vmem:[%s3 + $0x2d8] sm:$0xff]
    %v1605 = vld [vmem:[%s3 + $0x2e0] sm:$0xff]
    %v1606 = vld [vmem:[%s3 + $0x2e8] sm:$0xff]
    %v1607 = vld [vmem:[%s3 + $0x2f0] sm:$0xff]
    %v1608 = vld [vmem:[%s3 + $0x2f8] sm:$0xff]
    %v1609 = vld [vmem:[%s3 + $0x300] sm:$0xff]
    %v1610 = vld [vmem:[%s3 + $0x308] sm:$0xff]
    %v1611 = vld [vmem:[%s3 + $0x310] sm:$0xff]
    %v1612 = vld [vmem:[%s3 + $0x318] sm:$0xff]
    %v1613 = vld [vmem:[%s3 + $0x320] sm:$0xff]
    %v1614 = vld [vmem:[%s3 + $0x328] sm:$0xff]
    %v1615 = vld [vmem:[%s3 + $0x330] sm:$0xff]
    %v1616 = vld [vmem:[%s3 + $0x338] sm:$0xff]
    %v1617 = vld [vmem:[%s3 + $0x340] sm:$0xff]
    %v1618 = vld [vmem:[%s3 + $0x348] sm:$0xff]
    %v1619 = vld [vmem:[%s3 + $0x350] sm:$0xff]
    %v1620 = vld [vmem:[%s3 + $0x358] sm:$0xff]
    %v1621 = vld [vmem:[%s3 + $0x360] sm:$0xff]
    %v1622 = vld [vmem:[%s3 + $0x368] sm:$0xff]
    %v1623 = vld [vmem:[%s3 + $0x370] sm:$0xff]
    %v1624 = vld [vmem:[%s3 + $0x378] sm:$0xff]
    %v1625 = vld [vmem:[%s3 + $0x380] sm:$0xff]
    %v1626 = vld [vmem:[%s3 + $0x388] sm:$0xff]
    %v1627 = vld [vmem:[%s3 + $0x390] sm:$0xff]
    %v1628 = vld [vmem:[%s3 + $0x398] sm:$0xff]
    %v1629 = vld [vmem:[%s3 + $0x3a0] sm:$0xff]
    %v1630 = vld [vmem:[%s3 + $0x3a8] sm:$0xff]
    %v1631 = vld [vmem:[%s3 + $0x3b0] sm:$0xff]
    %v1632 = vld [vmem:[%s3 + $0x3b8] sm:$0xff]
    %v1633 = vld [vmem:[%s3 + $0x3c0] sm:$0xff]
    %v1634 = vld [vmem:[%s3 + $0x3c8] sm:$0xff]
    %v1635 = vld [vmem:[%s3 + $0x3d0] sm:$0xff]
    %v1636 = vld [vmem:[%s3 + $0x3d8] sm:$0xff]
    %v1637 = vld [vmem:[%s3 + $0x3e0] sm:$0xff]
    %v1638 = vld [vmem:[%s3 + $0x3e8] sm:$0xff]
    %v1639 = vld [vmem:[%s3 + $0x3f0] sm:$0xff]
    %v1640 = vld [vmem:[%s3 + $0x3f8] sm:$0xff]
    %v1641 = vld [vmem:[%s4] sm:$0x3]
    %v1643 = vlaneseq
    %v1644 = vshrl.u32 %v1643, 7
    %v1645 = vsub.s32 0, %v1644
    %v1646 = vrot.slane %v1641, %v1645
    %v1647 = vlaneseq
    %v1648 = vshrl.u32 %v1647, 7
    %v1649 = vsub.s32 1, %v1648
    %v1650 = vrot.slane %v1641, %v1649
    %1653 = vmatprep.subr.mxu0 %v1544
    %1654 = vmatpush1.msra.mxu0 %v1543
    %1655 = vmatprep.subr.mxu0 %v1542
    %1656 = vmatpush1.msra.mxu0 %v1541
    %1657 = vmatprep.subr.mxu0 %v1540
    %1658 = vmatpush1.msra.mxu0 %v1539
    %1659 = vmatprep.subr.mxu0 %v1538
    %1660 = vmatpush1.msra.mxu0 %v1537
    %1661 = vmatprep.subr.mxu0 %v1536
    %1662 = vmatpush1.msra.mxu0 %v1535
    %1663 = vmatprep.subr.mxu0 %v1534
    %1664 = vmatpush1.msra.mxu0 %v1533
    %1665 = vmatprep.subr.mxu0 %v1532
    %1666 = vmatpush1.msra.mxu0 %v1531
    %1667 = vmatprep.subr.mxu0 %v1530
    %1668 = vmatpush1.msra.mxu0 %v1529
    %1669 = vmatprep.subr.mxu0 %v1528
    %1670 = vmatpush1.msra.mxu0 %v1527
    %1671 = vmatprep.subr.mxu0 %v1526
    %1672 = vmatpush1.msra.mxu0 %v1525
    %1673 = vmatprep.subr.mxu0 %v1524
    %1674 = vmatpush1.msra.mxu0 %v1523
    %1675 = vmatprep.subr.mxu0 %v1522
    %1676 = vmatpush1.msra.mxu0 %v1521
    %1677 = vmatprep.subr.mxu0 %v1520
    %1678 = vmatpush1.msra.mxu0 %v1519
    %1679 = vmatprep.subr.mxu0 %v1518
    %1680 = vmatpush1.msra.mxu0 %v1517
    %1681 = vmatprep.subr.mxu0 %v1516
    %1682 = vmatpush1.msra.mxu0 %v1515
    %1683 = vmatprep.subr.mxu0 %v1514
    %1684 = vmatpush1.msra.mxu0 %v1513
    %1685 = vmatprep.subr.mxu0 %v1576
    %1686 = vmatpush2.msra.mxu0 %v1575
    %1687 = vmatprep.subr.mxu0 %v1574
    %1688 = vmatpush2.msra.mxu0 %v1573
    %1689 = vmatprep.subr.mxu0 %v1572
    %1690 = vmatpush2.msra.mxu0 %v1571
    %1691 = vmatprep.subr.mxu0 %v1570
    %1692 = vmatpush2.msra.mxu0 %v1569
    %1693 = vmatprep.subr.mxu0 %v1568
    %1694 = vmatpush2.msra.mxu0 %v1567
    %1695 = vmatprep.subr.mxu0 %v1566
    %1696 = vmatpush2.msra.mxu0 %v1565
    %1697 = vmatprep.subr.mxu0 %v1564
    %1698 = vmatpush2.msra.mxu0 %v1563
    %1699 = vmatprep.subr.mxu0 %v1562
    %1700 = vmatpush2.msra.mxu0 %v1561
    %1701 = vmatprep.subr.mxu0 %v1560
    %1702 = vmatpush2.msra.mxu0 %v1559
    %1703 = vmatprep.subr.mxu0 %v1558
    %1704 = vmatpush2.msra.mxu0 %v1557
    %1705 = vmatprep.subr.mxu0 %v1556
    %1706 = vmatpush2.msra.mxu0 %v1555
    %1707 = vmatprep.subr.mxu0 %v1554
    %1708 = vmatpush2.msra.mxu0 %v1553
    %1709 = vmatprep.subr.mxu0 %v1552
    %1710 = vmatpush2.msra.mxu0 %v1551
    %1711 = vmatprep.subr.mxu0 %v1550
    %1712 = vmatpush2.msra.mxu0 %v1549
    %1713 = vmatprep.subr.mxu0 %v1548
    %1714 = vmatpush2.msra.mxu0 %v1547
    %1715 = vmatprep.subr.mxu0 %v1546
    %1716 = vmatpush2.msra.mxu0 %v1545
    %1717 = vmatprep.mubr.f32.mxu0 %v1510
    %1718 = vmatmul.mubr.f32.gmra.mxu0 %v1509
    %v1719 = vpop.f32.mrf.mxu0
    %v1720 = vadd.f32 %v1646, %v1719
    %v1721 = vpop.f32.mrf.mxu0
    %v1722 = vadd.f32 %v1650, %v1721
    %1723 = vdwg.mxu0
    %1724 = vmatprep.subr.mxu0 %v1608
    %1725 = vmatpush1.msra.mxu0 %v1607
    %1726 = vmatprep.subr.mxu0 %v1606
    %1727 = vmatpush1.msra.mxu0 %v1605
    %1728 = vmatprep.subr.mxu0 %v1604
    %1729 = vmatpush1.msra.mxu0 %v1603
    %1730 = vmatprep.subr.mxu0 %v1602
    %1731 = vmatpush1.msra.mxu0 %v1601
    %1732 = vmatprep.subr.mxu0 %v1600
    %1733 = vmatpush1.msra.mxu0 %v1599
    %1734 = vmatprep.subr.mxu0 %v1598
    %1735 = vmatpush1.msra.mxu0 %v1597
    %1736 = vmatprep.subr.mxu0 %v1596
    %1737 = vmatpush1.msra.mxu0 %v1595
    %1738 = vmatprep.subr.mxu0 %v1594
    %1739 = vmatpush1.msra.mxu0 %v1593
    %1740 = vmatprep.subr.mxu0 %v1592
    %1741 = vmatpush1.msra.mxu0 %v1591
    %1742 = vmatprep.subr.mxu0 %v1590
    %1743 = vmatpush1.msra.mxu0 %v1589
    %1744 = vmatprep.subr.mxu0 %v1588
    %1745 = vmatpush1.msra.mxu0 %v1587
    %1746 = vmatprep.subr.mxu0 %v1586
    %1747 = vmatpush1.msra.mxu0 %v1585
    %1748 = vmatprep.subr.mxu0 %v1584
    %1749 = vmatpush1.msra.mxu0 %v1583
    %1750 = vmatprep.subr.mxu0 %v1582
    %1751 = vmatpush1.msra.mxu0 %v1581
    %1752 = vmatprep.subr.mxu0 %v1580
    %1753 = vmatpush1.msra.mxu0 %v1579
    %1754 = vmatprep.subr.mxu0 %v1578
    %1755 = vmatpush1.msra.mxu0 %v1577
    %1756 = vmatprep.subr.mxu0 %v1640
    %1757 = vmatpush2.msra.mxu0 %v1639
    %1758 = vmatprep.subr.mxu0 %v1638
    %1759 = vmatpush2.msra.mxu0 %v1637
    %1760 = vmatprep.subr.mxu0 %v1636
    %1761 = vmatpush2.msra.mxu0 %v1635
    %1762 = vmatprep.subr.mxu0 %v1634
    %1763 = vmatpush2.msra.mxu0 %v1633
    %1764 = vmatprep.subr.mxu0 %v1632
    %1765 = vmatpush2.msra.mxu0 %v1631
    %1766 = vmatprep.subr.mxu0 %v1630
    %1767 = vmatpush2.msra.mxu0 %v1629
    %1768 = vmatprep.subr.mxu0 %v1628
    %1769 = vmatpush2.msra.mxu0 %v1627
    %1770 = vmatprep.subr.mxu0 %v1626
    %1771 = vmatpush2.msra.mxu0 %v1625
    %1772 = vmatprep.subr.mxu0 %v1624
    %1773 = vmatpush2.msra.mxu0 %v1623
    %1774 = vmatprep.subr.mxu0 %v1622
    %1775 = vmatpush2.msra.mxu0 %v1621
    %1776 = vmatprep.subr.mxu0 %v1620
    %1777 = vmatpush2.msra.mxu0 %v1619
    %1778 = vmatprep.subr.mxu0 %v1618
    %1779 = vmatpush2.msra.mxu0 %v1617
    %1780 = vmatprep.subr.mxu0 %v1616
    %1781 = vmatpush2.msra.mxu0 %v1615
    %1782 = vmatprep.subr.mxu0 %v1614
    %1783 = vmatpush2.msra.mxu0 %v1613
    %1784 = vmatprep.subr.mxu0 %v1612
    %1785 = vmatpush2.msra.mxu0 %v1611
    %1786 = vmatprep.subr.mxu0 %v1610
    %1787 = vmatpush2.msra.mxu0 %v1609
    %1788 = vmatprep.mubr.f32.mxu0 %v1512
    %1789 = vmatmul.mubr.f32.gmra.mxu0 %v1511
    %v1790 = vpop.f32.mrf.mxu0
    %v1791 = vadd.f32 %v1720, %v1790
    %v1792 = vpop.f32.mrf.mxu0
    %v1793 = vadd.f32 %v1722, %v1792
    %1794 = vdwg.mxu0
    %vm1795 = vcmp.gt.f32.partialorder %v1791, 0.0
    %vm1796 = vcmp.gt.f32.partialorder %v1793, 0.0
    %v1797 = vmul.f32 %v1791, 0.2
    %v1798 = vmul.f32 %v1793, 0.2
    %v1799 = vsel %vm1795, %v1791, %v1797
    %v1800 = vsel %vm1796, %v1793, %v1798
    %v1801 = vld [vmem:[%s5] sm:$0xff]
    %v1802 = vld [vmem:[%s5 + $0x8] sm:$0xff]
    %v1803 = vld [vmem:[%s5 + $0x10] sm:$0xff]
    %v1804 = vld [vmem:[%s5 + $0x18] sm:$0xff]
    %v1805 = vld [vmem:[%s5 + $0x20] sm:$0xff]
    %v1806 = vld [vmem:[%s5 + $0x28] sm:$0xff]
    %v1807 = vld [vmem:[%s5 + $0x30] sm:$0xff]
    %v1808 = vld [vmem:[%s5 + $0x38] sm:$0xff]
    %v1809 = vld [vmem:[%s5 + $0x40] sm:$0xff]
    %v1810 = vld [vmem:[%s5 + $0x48] sm:$0xff]
    %v1811 = vld [vmem:[%s5 + $0x50] sm:$0xff]
    %v1812 = vld [vmem:[%s5 + $0x58] sm:$0xff]
    %v1813 = vld [vmem:[%s5 + $0x60] sm:$0xff]
    %v1814 = vld [vmem:[%s5 + $0x68] sm:$0xff]
    %v1815 = vld [vmem:[%s5 + $0x70] sm:$0xff]
    %v1816 = vld [vmem:[%s5 + $0x78] sm:$0xff]
    %v1817 = vld [vmem:[%s5 + $0x80] sm:$0xff]
    %v1818 = vld [vmem:[%s5 + $0x88] sm:$0xff]
    %v1819 = vld [vmem:[%s5 + $0x90] sm:$0xff]
    %v1820 = vld [vmem:[%s5 + $0x98] sm:$0xff]
    %v1821 = vld [vmem:[%s5 + $0xa0] sm:$0xff]
    %v1822 = vld [vmem:[%s5 + $0xa8] sm:$0xff]
    %v1823 = vld [vmem:[%s5 + $0xb0] sm:$0xff]
    %v1824 = vld [vmem:[%s5 + $0xb8] sm:$0xff]
    %v1825 = vld [vmem:[%s5 + $0xc0] sm:$0xff]
    %v1826 = vld [vmem:[%s5 + $0xc8] sm:$0xff]
    %v1827 = vld [vmem:[%s5 + $0xd0] sm:$0xff]
    %v1828 = vld [vmem:[%s5 + $0xd8] sm:$0xff]
    %v1829 = vld [vmem:[%s5 + $0xe0] sm:$0xff]
    %v1830 = vld [vmem:[%s5 + $0xe8] sm:$0xff]
    %v1831 = vld [vmem:[%s5 + $0xf0] sm:$0xff]
    %v1832 = vld [vmem:[%s5 + $0xf8] sm:$0xff]
    %v1833 = vld [vmem:[%s6] sm:$0x1]
    %v1835 = vlaneseq
    %v1836 = vshrl.u32 %v1835, 7
    %v1837 = vsub.s32 0, %v1836
    %v1838 = vrot.slane %v1833, %v1837
    %1840 = vmatprep.subr.mxu0 0.0
    %1841 = vmatpush1.msra.mxu0 %v1816
    %1842 = vmatprep.subr.mxu0 0.0
    %1843 = vmatpush1.msra.mxu0 %v1815
    %1844 = vmatprep.subr.mxu0 0.0
    %1845 = vmatpush1.msra.mxu0 %v1814
    %1846 = vmatprep.subr.mxu0 0.0
    %1847 = vmatpush1.msra.mxu0 %v1813
    %1848 = vmatprep.subr.mxu0 0.0
    %1849 = vmatpush1.msra.mxu0 %v1812
    %1850 = vmatprep.subr.mxu0 0.0
    %1851 = vmatpush1.msra.mxu0 %v1811
    %1852 = vmatprep.subr.mxu0 0.0
    %1853 = vmatpush1.msra.mxu0 %v1810
    %1854 = vmatprep.subr.mxu0 0.0
    %1855 = vmatpush1.msra.mxu0 %v1809
    %1856 = vmatprep.subr.mxu0 0.0
    %1857 = vmatpush1.msra.mxu0 %v1808
    %1858 = vmatprep.subr.mxu0 0.0
    %1859 = vmatpush1.msra.mxu0 %v1807
    %1860 = vmatprep.subr.mxu0 0.0
    %1861 = vmatpush1.msra.mxu0 %v1806
    %1862 = vmatprep.subr.mxu0 0.0
    %1863 = vmatpush1.msra.mxu0 %v1805
    %1864 = vmatprep.subr.mxu0 0.0
    %1865 = vmatpush1.msra.mxu0 %v1804
    %1866 = vmatprep.subr.mxu0 0.0
    %1867 = vmatpush1.msra.mxu0 %v1803
    %1868 = vmatprep.subr.mxu0 0.0
    %1869 = vmatpush1.msra.mxu0 %v1802
    %1870 = vmatprep.subr.mxu0 0.0
    %1871 = vmatpush1.msra.mxu0 %v1801
    %1872 = vmatprep.subr.mxu0 0.0
    %1873 = vmatpush2.msra.mxu0 %v1832
    %1874 = vmatprep.subr.mxu0 0.0
    %1875 = vmatpush2.msra.mxu0 %v1831
    %1876 = vmatprep.subr.mxu0 0.0
    %1877 = vmatpush2.msra.mxu0 %v1830
    %1878 = vmatprep.subr.mxu0 0.0
    %1879 = vmatpush2.msra.mxu0 %v1829
    %1880 = vmatprep.subr.mxu0 0.0
    %1881 = vmatpush2.msra.mxu0 %v1828
    %1882 = vmatprep.subr.mxu0 0.0
    %1883 = vmatpush2.msra.mxu0 %v1827
    %1884 = vmatprep.subr.mxu0 0.0
    %1885 = vmatpush2.msra.mxu0 %v1826
    %1886 = vmatprep.subr.mxu0 0.0
    %1887 = vmatpush2.msra.mxu0 %v1825
    %1888 = vmatprep.subr.mxu0 0.0
    %1889 = vmatpush2.msra.mxu0 %v1824
    %1890 = vmatprep.subr.mxu0 0.0
    %1891 = vmatpush2.msra.mxu0 %v1823
    %1892 = vmatprep.subr.mxu0 0.0
    %1893 = vmatpush2.msra.mxu0 %v1822
    %1894 = vmatprep.subr.mxu0 0.0
    %1895 = vmatpush2.msra.mxu0 %v1821
    %1896 = vmatprep.subr.mxu0 0.0
    %1897 = vmatpush2.msra.mxu0 %v1820
    %1898 = vmatprep.subr.mxu0 0.0
    %1899 = vmatpush2.msra.mxu0 %v1819
    %1900 = vmatprep.subr.mxu0 0.0
    %1901 = vmatpush2.msra.mxu0 %v1818
    %1902 = vmatprep.subr.mxu0 0.0
    %1903 = vmatpush2.msra.mxu0 %v1817
    %1904 = vmatprep.mubr.f32.mxu0 %v1800
    %1905 = vmatmul.mubr.f32.gmra.mxu0 %v1799
    %v1906 = vpop.f32.mrf.mxu0
    %v1907 = vadd.f32 %v1838, %v1906
    %v1908 = vpop.f32.mrf.mxu0
    %1909 = vdwg.mxu0
    %v1910 = vsub.f32 0.0, %v1907
    %v1911 = vmul.f32 %v1910, 1.442695
    %v1912 = vpow.pop %v1911
    %v1913 = vadd.f32 %v1912, 1.0
    %v1914 = vrcp.pop %v1913
    %v1915 = vmul.f32 1.0, %v1914
    %1916 = vst [vmem:[%s7] sm:$0xff] %v1915
  $region37: #{discriminador_forward.1} parent=0 // pred_fallthru
    _
  // Predicated region
  $region38: #{discriminador_forward.1} parent=0 // pred_check
    _
  $region39: #{discriminador_forward.1} parent=0 // pred_check_branch
    %1918 = sbr.rel (0) target = $region41
  $region40: #{discriminador_forward.1} parent=0 // pred_region
    _
  $region41: #{discriminador_forward.1} parent=0 // pred_fallthru
    _
  // Predicated region
  $region42: #{discriminador_forward.1} parent=0 // pred_check
    _
  $region43: #{discriminador_forward.1} parent=0 // pred_check_branch
    %1920 = sbr.rel (0) target = $region45
  $region44: #{discriminador_forward.1} parent=0 // pred_region
    _
  $region45: #{discriminador_forward.1} parent=0 // pred_fallthru
    _

</llo_original>
